<compile_context>
chip_gen: v5e
topology: v5e:2x2
jax: 0.10.0
libtpu: 0.0.40
codegen_flags: <defaults>
</compile_context>

<pallas_src>
import functools

import jax
import jax.numpy as jnp
import numpy as np
from jax.experimental import pallas as pl
from jax.experimental.pallas import tpu as pltpu

LANES = 128
_VMEM_LIMIT = 32 * 1024 * 1024   # per-step working set is ~5 MiB at tm=1024
_MAX_TILE = 1024


def _round_up(x, m):
    return (x + m - 1) // m * m


def _row_tiling(rows, max_tile=_MAX_TILE):
    """Row tile (multiple of 16 sublanes, bf16-friendly) + padded row count.
    Caps the tile at half the rows so the 1-D 'parallel' grid has >=2 steps
    whenever possible (lets v7x shard across its two TensorCores)."""
    rows16 = _round_up(max(rows, 16), 16)
    half = _round_up((rows16 + 1) // 2, 16)
    tm = max(16, min(max_tile, half))
    return tm, _round_up(rows16, tm)


# ---------------- Pallas kernels ----------------

def _conv_pool_kernel(p0_ref, p1_ref, t_ref, b_ref, o_ref):
    """Fused conv + bias + ReLU + 2x2 maxpool (one row panel per grid step).

    p0/p1 : [tm, K] bf16 row-patch panels for pooling row-offset qi=0/1.
    t     : [K, 256] bf16 Toeplitz weights; lanes 0:128 compute pooling
            col-offset qj=0, lanes 128:256 compute qj=1 (real outputs live in
            the first pooled_w*Cout lanes of each half, rest are zero).
    b     : [1, 128] f32 bias tiled over (pooled col, out channel) lanes.
    o     : [tm, 128] bf16 pooled+ReLU activations, lane = c_pool*Cout + co.
    """
    t = t_ref[...]
    y0 = jnp.dot(p0_ref[...], t, preferred_element_type=jnp.float32)
    y1 = jnp.dot(p1_ref[...], t, preferred_element_type=jnp.float32)
    s = jnp.maximum(jnp.maximum(y0[:, :LANES], y0[:, LANES:]),
                    jnp.maximum(y1[:, :LANES], y1[:, LANES:]))
    o_ref[...] = jnp.maximum(s + b_ref[...], 0.0).astype(o_ref.dtype)


def _fc_stack_kernel(a_ref, w1_ref, b1_ref, w2_ref, b2_ref, w3_ref, b3_ref,
                     z_ref, ls_ref, *, n_classes):
    """fc1+ReLU -> fc2+ReLU -> fc3 -> log_softmax, all in one kernel.
    Weights are zero-padded to 128 output lanes; the softmax reductions are
    masked to the real n_classes lanes.  Both outputs are full 128-lane
    (unmasked) stores."""
    h = jnp.dot(a_ref[...], w1_ref[...], preferred_element_type=jnp.float32) + b1_ref[...]
    h = jnp.maximum(h, 0.0).astype(jnp.bfloat16)
    h = jnp.dot(h, w2_ref[...], preferred_element_type=jnp.float32) + b2_ref[...]
    h = jnp.maximum(h, 0.0).astype(jnp.bfloat16)
    z = jnp.dot(h, w3_ref[...], preferred_element_type=jnp.float32) + b3_ref[...]

    lane = jax.lax.broadcasted_iota(jnp.int32, z.shape, 1)
    valid = lane < n_classes
    zm = jnp.where(valid, z, -jnp.inf)
    m = jnp.max(zm, axis=1, keepdims=True)
    e = jnp.where(valid, jnp.exp(z - m), 0.0)
    s = jnp.sum(e, axis=1, keepdims=True)

    z_ref[...] = z.astype(z_ref.dtype)
    ls_ref[...] = jnp.where(valid, z - m - jnp.log(s), 0.0).astype(ls_ref.dtype)


# ---------------- Wrappers (pallas_call) ----------------

def conv_pool(p0, p1, t_cat, b_row):
    """Runs the fused conv+ReLU+pool kernel over row panels.
    p0/p1: [rows, K] bf16; t_cat: [K, 256] bf16; b_row: [1, 128] f32.
    Returns [rows, 128] bf16."""
    rows, k = p0.shape
    tm, rows_pad = _row_tiling(rows)
    if rows_pad != rows:
        pad = ((0, rows_pad - rows), (0, 0))
        p0 = jnp.pad(p0, pad)
        p1 = jnp.pad(p1, pad)

    out = pl.pallas_call(
        _conv_pool_kernel,
        out_shape=jax.ShapeDtypeStruct((rows_pad, LANES), jnp.bfloat16),
        grid=(rows_pad // tm,),
        in_specs=[pl.BlockSpec((tm, k), lambda i: (i, 0)),
                  pl.BlockSpec((tm, k), lambda i: (i, 0)),
                  pl.BlockSpec((k, 2 * LANES), lambda i: (0, 0)),
                  pl.BlockSpec((1, LANES), lambda i: (0, 0))],
        out_specs=pl.BlockSpec((tm, LANES), lambda i: (i, 0)),
        compiler_params=pltpu.CompilerParams(
            dimension_semantics=("parallel",),
            vmem_limit_bytes=_VMEM_LIMIT),
    )(p0, p1, t_cat, b_row)
    return out[:rows]


def fc_stack(flat, pp, n_classes=10):
    """Fused fc1+ReLU, fc2+ReLU, fc3+log_softmax. flat: [M, 400] bf16."""
    m_rows, k = flat.shape
    tm, m_pad = _row_tiling(m_rows)
    a = jnp.pad(flat, ((0, m_pad - m_rows), (0, 0))) if m_pad != m_rows else flat

    def _const(arr):
        return pl.BlockSpec(arr.shape, lambda i: (0, 0))

    z, ls = pl.pallas_call(
        functools.partial(_fc_stack_kernel, n_classes=n_classes),
        out_shape=(jax.ShapeDtypeStruct((m_pad, LANES), jnp.float32),
                   jax.ShapeDtypeStruct((m_pad, LANES), jnp.float32)),
        grid=(m_pad // tm,),
        in_specs=[pl.BlockSpec((tm, k), lambda i: (i, 0)),
                  _const(pp["fc1_wt"]), _const(pp["fc1_b"]),
                  _const(pp["fc2_wt"]), _const(pp["fc2_b"]),
                  _const(pp["fc3_wt"]), _const(pp["fc3_b"])],
        out_specs=(pl.BlockSpec((tm, LANES), lambda i: (i, 0)),
                   pl.BlockSpec((tm, LANES), lambda i: (i, 0))),
        compiler_params=pltpu.CompilerParams(
            dimension_semantics=("parallel",),
            vmem_limit_bytes=_VMEM_LIMIT),
    )(a, pp["fc1_wt"], pp["fc1_b"], pp["fc2_wt"], pp["fc2_b"],
      pp["fc3_wt"], pp["fc3_b"])
    return z[:m_rows, :n_classes], ls[:m_rows, :n_classes]


# ---------------- Small XLA glue (cheap gathers on small arrays) ----------------

def _row_patches(x_flat, kh, pooled_h):
    """x_flat: [N, H, W*Cin] (channels fused onto lanes).  Returns two
    [N*pooled_h, kh*W*Cin] row-patch panels (pooling row-offsets qi=0,1):
        panel_qi[n*PH + r, ky*WC + l] = x_flat[n, 2r + qi + ky, l]."""
    n, _, wc = x_flat.shape
    panels = []
    for qi in (0, 1):
        slabs = [x_flat[:, qi + ky: qi + ky + 2 * pooled_h: 2, :]
                 for ky in range(kh)]
        panels.append(jnp.stack(slabs, axis=2).reshape(n * pooled_h, kh * wc))
    return panels


# ---------------- Parameters ----------------

def init_params(key):
    # Deterministic PyTorch-style U(-1/sqrt(fan_in), 1/sqrt(fan_in)) init.
    ks = jax.random.split(key, 10)

    def u(k_, shape, fan_in):
        bound = 1.0 / (fan_in ** 0.5)
        return jax.random.uniform(k_, shape, jnp.float32, -bound, bound)

    return {
        "conv1_w": u(ks[0], (6, 3, 5, 5), 3 * 5 * 5),
        "conv1_b": u(ks[1], (6,), 3 * 5 * 5),
        "conv2_w": u(ks[2], (16, 6, 5, 5), 6 * 5 * 5),
        "conv2_b": u(ks[3], (16,), 6 * 5 * 5),
        "fc1_w": u(ks[4], (120, 16 * 5 * 5), 16 * 5 * 5),
        "fc1_b": u(ks[5], (120,), 16 * 5 * 5),
        "fc2_w": u(ks[6], (84, 120), 120),
        "fc2_b": u(ks[7], (84,), 120),
        "fc3_w": u(ks[8], (10, 84), 84),
        "fc3_b": u(ks[9], (10,), 84),
    }


def _pool_toeplitz(w_oihw, in_w):
    """Toeplitz-expand a conv weight [Cout, Cin, KH, KW] along the input width
    and fold the 2x2-maxpool column decomposition.  Returns [KH*in_w*Cin, 256]:
    column 128*qj + c*Cout + co computes conv output column 2c+qj, channel co
    from a ky-row-patch panel row."""
    co_n, ci_n, kh, kw = w_oihw.shape
    pw = (in_w - kw + 1) // 2
    t = np.zeros((kh * in_w * ci_n, 2 * LANES), np.float32)
    for qj in (0, 1):
        for ky in range(kh):
            for kx in range(kw):
                for c in range(pw):
                    wcol = 2 * c + qj + kx
                    row = ky * in_w * ci_n + wcol * ci_n
                    col = LANES * qj + c * co_n
                    t[row:row + ci_n, col:col + co_n] = w_oihw[:, :, ky, kx].T
    return t


def prepare_params(p):
    """One-time weight prep (outside the jitted forward): Toeplitz-expand conv
    weights (pool column decomposition folded in), tile biases over the
    (pooled col, channel) lanes, permute fc1 columns from NCHW- to NHWC-flatten
    order, pad FC output dims to 128 lanes, cast matmul operands to bf16."""
    bf = jnp.bfloat16

    def padb(vec, tile=1):
        out = np.zeros((1, LANES), np.float32)
        v = np.tile(np.asarray(vec, np.float32), tile)
        out[0, :v.shape[0]] = v
        return jnp.asarray(out)

    def pad2(a, rows, cols):
        out = np.zeros((rows, cols), np.float32)
        out[:a.shape[0], :a.shape[1]] = a
        return jnp.asarray(out, bf)

    f1 = np.asarray(p["fc1_w"], np.float32).reshape(120, 16, 5, 5)
    f1 = f1.transpose(0, 2, 3, 1).reshape(120, 400).T          # [400, 120], (h,w,c) rows
    return {
        "t1": jnp.asarray(_pool_toeplitz(np.asarray(p["conv1_w"], np.float32), 32), bf),
        "b1": padb(p["conv1_b"], 14),
        "t2": jnp.asarray(_pool_toeplitz(np.asarray(p["conv2_w"], np.float32), 14), bf),
        "b2": padb(p["conv2_b"], 5),
        "fc1_wt": pad2(f1, 400, LANES), "fc1_b": padb(p["fc1_b"]),
        "fc2_wt": pad2(np.asarray(p["fc2_w"], np.float32).T, LANES, LANES),
        "fc2_b": padb(p["fc2_b"]),
        "fc3_wt": pad2(np.asarray(p["fc3_w"], np.float32).T, LANES, LANES),
        "fc3_b": padb(p["fc3_b"]),
    }


# ---------------- Forward ----------------

def simple_cnn_forward(pp, x_nchw):
    n = x_nchw.shape[0]
    # NCHW -> NHWC once, cast to bf16, fuse (W, Cin) onto the lane axis.
    xw = x_nchw.transpose(0, 2, 3, 1).astype(jnp.bfloat16).reshape(n, 32, 32 * 3)
    p0, p1 = _row_patches(xw, 5, 14)                     # 2 x [N*14, 480]
    a1 = conv_pool(p0, p1, pp["t1"], pp["b1"])           # [N*14, 128] bf16
    a1 = a1[:, :14 * 6].reshape(n, 14, 14 * 6)           # [N, 14, 84]: (r, c*6+ch)
    q0, q1 = _row_patches(a1, 5, 5)                      # 2 x [N*5, 420]
    a2 = conv_pool(q0, q1, pp["t2"], pp["b2"])           # [N*5, 128] bf16
    flat = a2[:, :5 * 16].reshape(n, 5 * 5 * 16)         # [N, 400], (h, w, c) order
    return fc_stack(flat, pp)                            # (logits, log_probs)


# ---------------- Pure-JAX reference (mirrors the PyTorch module) ----------------

def reference_forward(params, x):
    def conv(x_, w, b):
        y = jax.lax.conv_general_dilated(
            x_, w, (1, 1), "VALID", dimension_numbers=("NCHW", "OIHW", "NCHW"))
        return y + b.reshape(1, -1, 1, 1)

    def pool(x_):
        return jax.lax.reduce_window(x_, -jnp.inf, jax.lax.max,
                                     (1, 1, 2, 2), (1, 1, 2, 2), "VALID")

    x1 = pool(jax.nn.relu(conv(x, params["conv1_w"], params["conv1_b"])))
    x2 = pool(jax.nn.relu(conv(x1, params["conv2_w"], params["conv2_b"])))
    flat = x2.reshape(x.shape[0], -1)
    x3 = jax.nn.relu(flat @ params["fc1_w"].T + params["fc1_b"])
    x4 = jax.nn.relu(x3 @ params["fc2_w"].T + params["fc2_b"])
    z = x4 @ params["fc3_w"].T + params["fc3_b"]
    return z, jax.nn.log_softmax(z, axis=1)


if __name__ == "__main__":
    key = jax.random.PRNGKey(0)
    pkey, xkey = jax.random.split(key)
    raw_params = init_params(pkey)
    params = prepare_params(raw_params)   # weight prep hoisted, done once
    # The module's 16*5*5 flatten implies a 3x32x32 input (CIFAR-style LeNet).
    x = jax.random.normal(xkey, (2, 3, 32, 32), jnp.float32)

    logits, logp = jax.jit(simple_cnn_forward)(params, x)
    jax.block_until_ready((logits, logp))
    assert logits.shape == (2, 10) and logp.shape == (2, 10)

    ref_logits, ref_logp = jax.jit(reference_forward)(raw_params, x)
    jax.block_until_ready((ref_logits, ref_logp))
    np.testing.assert_allclose(np.asarray(logits), np.asarray(ref_logits),
                               rtol=5e-2, atol=5e-2)
    np.testing.assert_allclose(np.asarray(logp), np.asarray(ref_logp),
                               rtol=5e-2, atol=5e-2)
    print("KERNEL_OK")
</pallas_src>

<mosaic_0001>
module attributes {stable_mosaic.version = 11 : i64} {
  func.func @_conv_pool_kernel(%arg0: i32, %arg1: memref<16x480xbf16, #tpu.memory_space<vmem>>, %arg2: memref<16x480xbf16, #tpu.memory_space<vmem>>, %arg3: memref<480x256xbf16, #tpu.memory_space<vmem>>, %arg4: memref<1x128xf32, #tpu.memory_space<vmem>>, %arg5: memref<16x128xbf16, #tpu.memory_space<vmem>>) attributes {dimension_semantics = [#tpu.dimension_semantics<parallel>], iteration_bounds = array<i64: 2>, scalar_prefetch = 0 : i64, scratch_operands = 0 : i64, tpu.core_type = #tpu.core_type<tc>, window_params = [{transform_indices = @transform_0, window_bounds = array<i64: 16, 480>}, {transform_indices = @transform_1, window_bounds = array<i64: 16, 480>}, {pipeline_mode = #tpu.pipeline_mode<synchronous>, transform_indices = @transform_2, window_bounds = array<i64: 480, 256>}, {pipeline_mode = #tpu.pipeline_mode<synchronous>, transform_indices = @transform_3, window_bounds = array<i64: 1, 128>}, {transform_indices = @transform_4, window_bounds = array<i64: 16, 128>}]} {
    %c0 = arith.constant 0 : index
    %c0_0 = arith.constant 0 : index
    %0 = vector.load %arg3[%c0, %c0_0] : memref<480x256xbf16, #tpu.memory_space<vmem>>, vector<480x256xbf16>
    %c0_1 = arith.constant 0 : index
    %c0_2 = arith.constant 0 : index
    %1 = vector.load %arg1[%c0_1, %c0_2] : memref<16x480xbf16, #tpu.memory_space<vmem>>, vector<16x480xbf16>
    %cst = arith.constant dense<0.000000e+00> : vector<16x256xf32>
    %2 = tpu.matmul %1, %0, %cst {dimension_numbers = #tpu.dot_dimension_numbers<[1], [0], [0], [1], [0, 0, 1, 1], [], []>} : vector<16x480xbf16>, vector<480x256xbf16>, vector<16x256xf32> -> vector<16x256xf32>
    %c0_3 = arith.constant 0 : index
    %c0_4 = arith.constant 0 : index
    %3 = vector.load %arg2[%c0_3, %c0_4] : memref<16x480xbf16, #tpu.memory_space<vmem>>, vector<16x480xbf16>
    %cst_5 = arith.constant dense<0.000000e+00> : vector<16x256xf32>
    %4 = tpu.matmul %3, %0, %cst_5 {dimension_numbers = #tpu.dot_dimension_numbers<[1], [0], [0], [1], [0, 0, 1, 1], [], []>} : vector<16x480xbf16>, vector<480x256xbf16>, vector<16x256xf32> -> vector<16x256xf32>
    %5 = vector.extract_strided_slice %2 {offsets = [0, 0], sizes = [16, 128], strides = [1, 1]} : vector<16x256xf32> to vector<16x128xf32>
    %6 = vector.extract_strided_slice %2 {offsets = [0, 128], sizes = [16, 128], strides = [1, 1]} : vector<16x256xf32> to vector<16x128xf32>
    %7 = arith.maximumf %5, %6 : vector<16x128xf32>
    %8 = vector.extract_strided_slice %4 {offsets = [0, 0], sizes = [16, 128], strides = [1, 1]} : vector<16x256xf32> to vector<16x128xf32>
    %9 = vector.extract_strided_slice %4 {offsets = [0, 128], sizes = [16, 128], strides = [1, 1]} : vector<16x256xf32> to vector<16x128xf32>
    %10 = arith.maximumf %8, %9 : vector<16x128xf32>
    %11 = arith.maximumf %7, %10 : vector<16x128xf32>
    %c0_6 = arith.constant 0 : index
    %c0_7 = arith.constant 0 : index
    %12 = vector.load %arg4[%c0_6, %c0_7] : memref<1x128xf32, #tpu.memory_space<vmem>>, vector<1x128xf32>
    %13 = vector.broadcast %12 : vector<1x128xf32> to vector<16x128xf32>
    %14 = arith.addf %11, %13 : vector<16x128xf32>
    %cst_8 = arith.constant 0.000000e+00 : f32
    %15 = vector.broadcast %cst_8 : f32 to vector<16x128xf32>
    %16 = arith.maximumf %14, %15 : vector<16x128xf32>
    %17 = arith.truncf %16 : vector<16x128xf32> to vector<16x128xbf16>
    %c0_9 = arith.constant 0 : index
    %c0_10 = arith.constant 0 : index
    %18 = vector.load %arg5[%c0_9, %c0_10] : memref<16x128xbf16, #tpu.memory_space<vmem>>, vector<16x128xbf16>
    tpu.vector_store %arg5[%c0_9, %c0_10], %17 {strides = array<i32>} : memref<16x128xbf16, #tpu.memory_space<vmem>>, vector<16x128xbf16>,
    return
  }
  func.func @transform_0(%arg0: i32) -> (i32, i32) {
    %c0_i32 = arith.constant 0 : i32
    %c0_i32_0 = arith.constant 0 : i32
    return %arg0, %c0_i32 : i32, i32
  }
  func.func @transform_1(%arg0: i32) -> (i32, i32) {
    %c0_i32 = arith.constant 0 : i32
    %c0_i32_0 = arith.constant 0 : i32
    return %arg0, %c0_i32 : i32, i32
  }
  func.func @transform_2(%arg0: i32) -> (i32, i32) {
    %c0_i32 = arith.constant 0 : i32
    %c0_i32_0 = arith.constant 0 : i32
    %c0_i32_1 = arith.constant 0 : i32
    return %c0_i32, %c0_i32_0 : i32, i32
  }
  func.func @transform_3(%arg0: i32) -> (i32, i32) {
    %c0_i32 = arith.constant 0 : i32
    %c0_i32_0 = arith.constant 0 : i32
    %c0_i32_1 = arith.constant 0 : i32
    return %c0_i32, %c0_i32_0 : i32, i32
  }
  func.func @transform_4(%arg0: i32) -> (i32, i32) {
    %c0_i32 = arith.constant 0 : i32
    %c0_i32_0 = arith.constant 0 : i32
    return %arg0, %c0_i32 : i32, i32
  }
}

module attributes {stable_mosaic.version = 11 : i64} {
  func.func @_fc_stack_kernel(%arg0: i32, %arg1: memref<16x400xbf16, #tpu.memory_space<vmem>>, %arg2: memref<400x128xbf16, #tpu.memory_space<vmem>>, %arg3: memref<1x128xf32, #tpu.memory_space<vmem>>, %arg4: memref<128x128xbf16, #tpu.memory_space<vmem>>, %arg5: memref<1x128xf32, #tpu.memory_space<vmem>>, %arg6: memref<128x128xbf16, #tpu.memory_space<vmem>>, %arg7: memref<1x128xf32, #tpu.memory_space<vmem>>, %arg8: memref<16x128xf32, #tpu.memory_space<vmem>>, %arg9: memref<16x128xf32, #tpu.memory_space<vmem>>) attributes {dimension_semantics = [#tpu.dimension_semantics<parallel>], iteration_bounds = array<i64: 1>, scalar_prefetch = 0 : i64, scratch_operands = 0 : i64, tpu.core_type = #tpu.core_type<tc>, window_params = [{transform_indices = @transform_0, window_bounds = array<i64: 16, 400>}, {pipeline_mode = #tpu.pipeline_mode<synchronous>, transform_indices = @transform_1, window_bounds = array<i64: 400, 128>}, {pipeline_mode = #tpu.pipeline_mode<synchronous>, transform_indices = @transform_2, window_bounds = array<i64: 1, 128>}, {pipeline_mode = #tpu.pipeline_mode<synchronous>, transform_indices = @transform_3, window_bounds = array<i64: 128, 128>}, {pipeline_mode = #tpu.pipeline_mode<synchronous>, transform_indices = @transform_4, window_bounds = array<i64: 1, 128>}, {pipeline_mode = #tpu.pipeline_mode<synchronous>, transform_indices = @transform_5, window_bounds = array<i64: 128, 128>}, {pipeline_mode = #tpu.pipeline_mode<synchronous>, transform_indices = @transform_6, window_bounds = array<i64: 1, 128>}, {transform_indices = @transform_7, window_bounds = array<i64: 16, 128>}, {transform_indices = @transform_8, window_bounds = array<i64: 16, 128>}]} {
    %c0 = arith.constant 0 : index
    %c0_0 = arith.constant 0 : index
    %0 = vector.load %arg1[%c0, %c0_0] : memref<16x400xbf16, #tpu.memory_space<vmem>>, vector<16x400xbf16>
    %c0_1 = arith.constant 0 : index
    %c0_2 = arith.constant 0 : index
    %1 = vector.load %arg2[%c0_1, %c0_2] : memref<400x128xbf16, #tpu.memory_space<vmem>>, vector<400x128xbf16>
    %cst = arith.constant dense<0.000000e+00> : vector<16x128xf32>
    %2 = tpu.matmul %0, %1, %cst {dimension_numbers = #tpu.dot_dimension_numbers<[1], [0], [0], [1], [0, 0, 1, 1], [], []>} : vector<16x400xbf16>, vector<400x128xbf16>, vector<16x128xf32> -> vector<16x128xf32>
    %c0_3 = arith.constant 0 : index
    %c0_4 = arith.constant 0 : index
    %3 = vector.load %arg3[%c0_3, %c0_4] : memref<1x128xf32, #tpu.memory_space<vmem>>, vector<1x128xf32>
    %4 = vector.broadcast %3 : vector<1x128xf32> to vector<16x128xf32>
    %5 = arith.addf %2, %4 : vector<16x128xf32>
    %cst_5 = arith.constant 0.000000e+00 : f32
    %6 = vector.broadcast %cst_5 : f32 to vector<16x128xf32>
    %7 = arith.maximumf %5, %6 : vector<16x128xf32>
    %8 = arith.truncf %7 : vector<16x128xf32> to vector<16x128xbf16>
    %c0_6 = arith.constant 0 : index
    %c0_7 = arith.constant 0 : index
    %9 = vector.load %arg4[%c0_6, %c0_7] : memref<128x128xbf16, #tpu.memory_space<vmem>>, vector<128x128xbf16>
    %cst_8 = arith.constant dense<0.000000e+00> : vector<16x128xf32>
    %10 = tpu.matmul %8, %9, %cst_8 {dimension_numbers = #tpu.dot_dimension_numbers<[1], [0], [0], [1], [0, 0, 1, 1], [], []>} : vector<16x128xbf16>, vector<128x128xbf16>, vector<16x128xf32> -> vector<16x128xf32>
    %c0_9 = arith.constant 0 : index
    %c0_10 = arith.constant 0 : index
    %11 = vector.load %arg5[%c0_9, %c0_10] : memref<1x128xf32, #tpu.memory_space<vmem>>, vector<1x128xf32>
    %12 = vector.broadcast %11 : vector<1x128xf32> to vector<16x128xf32>
    %13 = arith.addf %10, %12 : vector<16x128xf32>
    %cst_11 = arith.constant 0.000000e+00 : f32
    %14 = vector.broadcast %cst_11 : f32 to vector<16x128xf32>
    %15 = arith.maximumf %13, %14 : vector<16x128xf32>
    %16 = arith.truncf %15 : vector<16x128xf32> to vector<16x128xbf16>
    %c0_12 = arith.constant 0 : index
    %c0_13 = arith.constant 0 : index
    %17 = vector.load %arg6[%c0_12, %c0_13] : memref<128x128xbf16, #tpu.memory_space<vmem>>, vector<128x128xbf16>
    %cst_14 = arith.constant dense<0.000000e+00> : vector<16x128xf32>
    %18 = tpu.matmul %16, %17, %cst_14 {dimension_numbers = #tpu.dot_dimension_numbers<[1], [0], [0], [1], [0, 0, 1, 1], [], []>} : vector<16x128xbf16>, vector<128x128xbf16>, vector<16x128xf32> -> vector<16x128xf32>
    %c0_15 = arith.constant 0 : index
    %c0_16 = arith.constant 0 : index
    %19 = vector.load %arg7[%c0_15, %c0_16] : memref<1x128xf32, #tpu.memory_space<vmem>>, vector<1x128xf32>
    %20 = vector.broadcast %19 : vector<1x128xf32> to vector<16x128xf32>
    %21 = arith.addf %18, %20 : vector<16x128xf32>
    %22 = tpu.iota {dimensions = array<i32: 1>} : vector<16x128xi32>
    %c10_i32 = arith.constant 10 : i32
    %23 = vector.broadcast %c10_i32 : i32 to vector<16x128xi32>
    %24 = arith.cmpi slt, %22, %23 : vector<16x128xi32>
    %cst_17 = arith.constant 0xFF800000 : f32
    %25 = vector.broadcast %cst_17 : f32 to vector<16x128xf32>
    %26 = arith.select %24, %21, %25 : vector<16x128xi1>, vector<16x128xf32>
    %cst_18 = arith.constant dense<0xFF800000> : vector<16xf32>
    %27 = vector.multi_reduction <maximumf>, %26, %cst_18 [1] : vector<16x128xf32> to vector<16xf32>
    %28 = vector.shape_cast %27 : vector<16xf32> to vector<16x1xf32>
    %29 = vector.broadcast %28 : vector<16x1xf32> to vector<16x128xf32>
    %30 = arith.subf %21, %29 : vector<16x128xf32>
    %31 = math.exp %30 : vector<16x128xf32>
    %cst_19 = arith.constant 0.000000e+00 : f32
    %32 = vector.broadcast %cst_19 : f32 to vector<16x128xf32>
    %33 = arith.select %24, %31, %32 : vector<16x128xi1>, vector<16x128xf32>
    %cst_20 = arith.constant dense<0.000000e+00> : vector<16xf32>
    %34 = vector.multi_reduction <add>, %33, %cst_20 [1] : vector<16x128xf32> to vector<16xf32>
    %35 = vector.shape_cast %34 : vector<16xf32> to vector<16x1xf32>
    %c0_21 = arith.constant 0 : index
    %c0_22 = arith.constant 0 : index
    %36 = vector.load %arg8[%c0_21, %c0_22] : memref<16x128xf32, #tpu.memory_space<vmem>>, vector<16x128xf32>
    tpu.vector_store %arg8[%c0_21, %c0_22], %21 {strides = array<i32>} : memref<16x128xf32, #tpu.memory_space<vmem>>, vector<16x128xf32>,
    %37 = vector.broadcast %28 : vector<16x1xf32> to vector<16x128xf32>
    %38 = arith.subf %21, %37 : vector<16x128xf32>
    %39 = math.log %35 : vector<16x1xf32>
    %40 = vector.broadcast %39 : vector<16x1xf32> to vector<16x128xf32>
    %41 = arith.subf %38, %40 : vector<16x128xf32>
    %cst_23 = arith.constant 0.000000e+00 : f32
    %42 = vector.broadcast %cst_23 : f32 to vector<16x128xf32>
    %43 = arith.select %24, %41, %42 : vector<16x128xi1>, vector<16x128xf32>
    %c0_24 = arith.constant 0 : index
    %c0_25 = arith.constant 0 : index
    %44 = vector.load %arg9[%c0_24, %c0_25] : memref<16x128xf32, #tpu.memory_space<vmem>>, vector<16x128xf32>
    tpu.vector_store %arg9[%c0_24, %c0_25], %43 {strides = array<i32>} : memref<16x128xf32, #tpu.memory_space<vmem>>, vector<16x128xf32>,
    return
  }
  func.func @transform_0(%arg0: i32) -> (i32, i32) {
    %c0_i32 = arith.constant 0 : i32
    %c0_i32_0 = arith.constant 0 : i32
    return %arg0, %c0_i32 : i32, i32
  }
  func.func @transform_1(%arg0: i32) -> (i32, i32) {
    %c0_i32 = arith.constant 0 : i32
    %c0_i32_0 = arith.constant 0 : i32
    %c0_i32_1 = arith.constant 0 : i32
    return %c0_i32, %c0_i32_0 : i32, i32
  }
  func.func @transform_2(%arg0: i32) -> (i32, i32) {
    %c0_i32 = arith.constant 0 : i32
    %c0_i32_0 = arith.constant 0 : i32
    %c0_i32_1 = arith.constant 0 : i32
    return %c0_i32, %c0_i32_0 : i32, i32
  }
  func.func @transform_3(%arg0: i32) -> (i32, i32) {
    %c0_i32 = arith.constant 0 : i32
    %c0_i32_0 = arith.constant 0 : i32
    %c0_i32_1 = arith.constant 0 : i32
    return %c0_i32, %c0_i32_0 : i32, i32
  }
  func.func @transform_4(%arg0: i32) -> (i32, i32) {
    %c0_i32 = arith.constant 0 : i32
    %c0_i32_0 = arith.constant 0 : i32
    %c0_i32_1 = arith.constant 0 : i32
    return %c0_i32, %c0_i32_0 : i32, i32
  }
  func.func @transform_5(%arg0: i32) -> (i32, i32) {
    %c0_i32 = arith.constant 0 : i32
    %c0_i32_0 = arith.constant 0 : i32
    %c0_i32_1 = arith.constant 0 : i32
    return %c0_i32, %c0_i32_0 : i32, i32
  }
  func.func @transform_6(%arg0: i32) -> (i32, i32) {
    %c0_i32 = arith.constant 0 : i32
    %c0_i32_0 = arith.constant 0 : i32
    %c0_i32_1 = arith.constant 0 : i32
    return %c0_i32, %c0_i32_0 : i32, i32
  }
  func.func @transform_7(%arg0: i32) -> (i32, i32) {
    %c0_i32 = arith.constant 0 : i32
    %c0_i32_0 = arith.constant 0 : i32
    return %arg0, %c0_i32 : i32, i32
  }
  func.func @transform_8(%arg0: i32) -> (i32, i32) {
    %c0_i32 = arith.constant 0 : i32
    %c0_i32_0 = arith.constant 0 : i32
    return %arg0, %c0_i32 : i32, i32
  }
}

module attributes {stable_mosaic.version = 11 : i64} {
  func.func @_conv_pool_kernel(%arg0: i32, %arg1: memref<16x420xbf16, #tpu.memory_space<vmem>>, %arg2: memref<16x420xbf16, #tpu.memory_space<vmem>>, %arg3: memref<420x256xbf16, #tpu.memory_space<vmem>>, %arg4: memref<1x128xf32, #tpu.memory_space<vmem>>, %arg5: memref<16x128xbf16, #tpu.memory_space<vmem>>) attributes {dimension_semantics = [#tpu.dimension_semantics<parallel>], iteration_bounds = array<i64: 1>, scalar_prefetch = 0 : i64, scratch_operands = 0 : i64, tpu.core_type = #tpu.core_type<tc>, window_params = [{transform_indices = @transform_0, window_bounds = array<i64: 16, 420>}, {transform_indices = @transform_1, window_bounds = array<i64: 16, 420>}, {pipeline_mode = #tpu.pipeline_mode<synchronous>, transform_indices = @transform_2, window_bounds = array<i64: 420, 256>}, {pipeline_mode = #tpu.pipeline_mode<synchronous>, transform_indices = @transform_3, window_bounds = array<i64: 1, 128>}, {transform_indices = @transform_4, window_bounds = array<i64: 16, 128>}]} {
    %c0 = arith.constant 0 : index
    %c0_0 = arith.constant 0 : index
    %0 = vector.load %arg3[%c0, %c0_0] : memref<420x256xbf16, #tpu.memory_space<vmem>>, vector<420x256xbf16>
    %c0_1 = arith.constant 0 : index
    %c0_2 = arith.constant 0 : index
    %1 = vector.load %arg1[%c0_1, %c0_2] : memref<16x420xbf16, #tpu.memory_space<vmem>>, vector<16x420xbf16>
    %cst = arith.constant dense<0.000000e+00> : vector<16x256xf32>
    %2 = tpu.matmul %1, %0, %cst {dimension_numbers = #tpu.dot_dimension_numbers<[1], [0], [0], [1], [0, 0, 1, 1], [], []>} : vector<16x420xbf16>, vector<420x256xbf16>, vector<16x256xf32> -> vector<16x256xf32>
    %c0_3 = arith.constant 0 : index
    %c0_4 = arith.constant 0 : index
    %3 = vector.load %arg2[%c0_3, %c0_4] : memref<16x420xbf16, #tpu.memory_space<vmem>>, vector<16x420xbf16>
    %cst_5 = arith.constant dense<0.000000e+00> : vector<16x256xf32>
    %4 = tpu.matmul %3, %0, %cst_5 {dimension_numbers = #tpu.dot_dimension_numbers<[1], [0], [0], [1], [0, 0, 1, 1], [], []>} : vector<16x420xbf16>, vector<420x256xbf16>, vector<16x256xf32> -> vector<16x256xf32>
    %5 = vector.extract_strided_slice %2 {offsets = [0, 0], sizes = [16, 128], strides = [1, 1]} : vector<16x256xf32> to vector<16x128xf32>
    %6 = vector.extract_strided_slice %2 {offsets = [0, 128], sizes = [16, 128], strides = [1, 1]} : vector<16x256xf32> to vector<16x128xf32>
    %7 = arith.maximumf %5, %6 : vector<16x128xf32>
    %8 = vector.extract_strided_slice %4 {offsets = [0, 0], sizes = [16, 128], strides = [1, 1]} : vector<16x256xf32> to vector<16x128xf32>
    %9 = vector.extract_strided_slice %4 {offsets = [0, 128], sizes = [16, 128], strides = [1, 1]} : vector<16x256xf32> to vector<16x128xf32>
    %10 = arith.maximumf %8, %9 : vector<16x128xf32>
    %11 = arith.maximumf %7, %10 : vector<16x128xf32>
    %c0_6 = arith.constant 0 : index
    %c0_7 = arith.constant 0 : index
    %12 = vector.load %arg4[%c0_6, %c0_7] : memref<1x128xf32, #tpu.memory_space<vmem>>, vector<1x128xf32>
    %13 = vector.broadcast %12 : vector<1x128xf32> to vector<16x128xf32>
    %14 = arith.addf %11, %13 : vector<16x128xf32>
    %cst_8 = arith.constant 0.000000e+00 : f32
    %15 = vector.broadcast %cst_8 : f32 to vector<16x128xf32>
    %16 = arith.maximumf %14, %15 : vector<16x128xf32>
    %17 = arith.truncf %16 : vector<16x128xf32> to vector<16x128xbf16>
    %c0_9 = arith.constant 0 : index
    %c0_10 = arith.constant 0 : index
    %18 = vector.load %arg5[%c0_9, %c0_10] : memref<16x128xbf16, #tpu.memory_space<vmem>>, vector<16x128xbf16>
    tpu.vector_store %arg5[%c0_9, %c0_10], %17 {strides = array<i32>} : memref<16x128xbf16, #tpu.memory_space<vmem>>, vector<16x128xbf16>,
    return
  }
  func.func @transform_0(%arg0: i32) -> (i32, i32) {
    %c0_i32 = arith.constant 0 : i32
    %c0_i32_0 = arith.constant 0 : i32
    return %arg0, %c0_i32 : i32, i32
  }
  func.func @transform_1(%arg0: i32) -> (i32, i32) {
    %c0_i32 = arith.constant 0 : i32
    %c0_i32_0 = arith.constant 0 : i32
    return %arg0, %c0_i32 : i32, i32
  }
  func.func @transform_2(%arg0: i32) -> (i32, i32) {
    %c0_i32 = arith.constant 0 : i32
    %c0_i32_0 = arith.constant 0 : i32
    %c0_i32_1 = arith.constant 0 : i32
    return %c0_i32, %c0_i32_0 : i32, i32
  }
  func.func @transform_3(%arg0: i32) -> (i32, i32) {
    %c0_i32 = arith.constant 0 : i32
    %c0_i32_0 = arith.constant 0 : i32
    %c0_i32_1 = arith.constant 0 : i32
    return %c0_i32, %c0_i32_0 : i32, i32
  }
  func.func @transform_4(%arg0: i32) -> (i32, i32) {
    %c0_i32 = arith.constant 0 : i32
    %c0_i32_0 = arith.constant 0 : i32
    return %arg0, %c0_i32 : i32, i32
  }
}

</mosaic_0001>

<llo_original>
// kernel: simple_cnn_forward.3
$region0: #{simple_cnn_forward.3}
  #allocation0 [shape = 'u32[]', space=smem, size = 0x4, offset = 0x4, fixed_abs, tag = 'smem constant byte address 0x4 - core index']
  #allocation1 [shape = 'u32[72,128]{1,0:T(1,128)}', space=vmem, size = 0x9000, scoped, tag = 'internal scratch']
  %s0 = inlined_call_operand.vmem [shape: bf16[32,480], index: 0, kind: input, shape index: {}]
  %s1 = inlined_call_operand.vmem [shape: bf16[32,480], index: 1, kind: input, shape index: {}]
  %s2 = inlined_call_operand.vmem [shape: bf16[480,256], index: 2, kind: input, shape index: {}]
  %s3 = inlined_call_operand.vmem [shape: f32[1,128], index: 3, kind: input, shape index: {}]
  %s4 = inlined_call_operand.vmem [shape: bf16[32,128], index: 4, kind: output, shape index: {}]
  %s5 = sld [smem:[#allocation0]]
  $region49: #{simple_cnn_forward.3} parent=0
    _
  %s7 = ssub.s32 1, %s5
  %s8 = scalar_select 0, %s7, %s5
  loop: start=0, step=1, limit=4
  $region2: #{simple_cnn_forward.3} parent=0 // loop_pre_header
    _
  $region3: #{simple_cnn_forward.3} parent=0 // loop_header
    %s10 = sphi 0, %s14
    %p11 = scmp.ge.s32.totalorder %s10, 4
    %s20 = sphi 0, %s22
    %s23 = sphi 0, %s20
    %s24 = sphi 0, %s23
    %s40 = sphi 0, %s24
    %s46 = sphi 0, %s48
    %s49 = sphi 0, %s46
    %s50 = sphi 0, %s49
    %s66 = sphi 0, %s50
    %s70 = sphi 0, %s70
    %s72 = sphi 0, %s70
    %s73 = sphi 0, %s72
    %s87 = sphi 0, %s73
    %s91 = sphi 0, %s91
    %s93 = sphi 0, %s91
    %s94 = sphi 0, %s93
    %s108 = sphi 0, %s94
    %s114 = sphi 0, %s116
    %s117 = sphi 0, %s114
    %s118 = sphi 0, %s117
    %s134 = sphi 0, %s118
  $region4: #{simple_cnn_forward.3} parent=0 // loop_header_branch
    %13 = sbr.rel (%p11) target = $region8
  $region5: #{simple_cnn_forward.3} parent=0 // loop_body
    %s15 = ssub.s32 %s10, 1
    %s16 = ssub.s32 %s10, 2
    %s17 = sadd.s32 %s10, 1
    %s18 = ssub.s32 %s10, %s17
    %p19 = scmp.eq.s32.totalorder %s18, 0
    %s21 = sadd.s32 %s20, 1
    %s22 = scalar_select %p19, %s20, %s21
    %p25 = pneg %p19
    %p26 = scmp.eq.s32.totalorder %s10, 1
    %p27 = por %p25, %p26
    %p28 = scmp.ne.s32.totalorder %s20, %s23
    %p29 = scmp.eq.s32.totalorder %s10, 0
    %p30 = por %p28, %p29
    %p31 = scmp.ne.s32.totalorder %s20, %s23
    %p32 = scmp.eq.s32.totalorder %s15, 1
    %p33 = por %p31, %p32
    %p34 = scmp.ne.s32.totalorder %s23, %s24
    %p35 = scmp.eq.s32.totalorder %s15, 0
    %p36 = por %p34, %p35
    %p37 = scmp.ne.s32.totalorder %s23, %s24
    %p38 = scmp.eq.s32.totalorder %s16, 1
    %p39 = por %p37, %p38
    %p41 = scmp.ne.s32.totalorder %s24, %s40
    %p42 = scmp.eq.s32.totalorder %s16, 0
    %p43 = por %p41, %p42
    %s44 = ssub.s32 %s10, %s17
    %p45 = scmp.eq.s32.totalorder %s44, 0
    %s47 = sadd.s32 %s46, 1
    %s48 = scalar_select %p45, %s46, %s47
    %p51 = pneg %p45
    %p52 = scmp.eq.s32.totalorder %s10, 1
    %p53 = por %p51, %p52
    %p54 = scmp.ne.s32.totalorder %s46, %s49
    %p55 = scmp.eq.s32.totalorder %s10, 0
    %p56 = por %p54, %p55
    %p57 = scmp.ne.s32.totalorder %s46, %s49
    %p58 = scmp.eq.s32.totalorder %s15, 1
    %p59 = por %p57, %p58
    %p60 = scmp.ne.s32.totalorder %s49, %s50
    %p61 = scmp.eq.s32.totalorder %s15, 0
    %p62 = por %p60, %p61
    %p63 = scmp.ne.s32.totalorder %s49, %s50
    %p64 = scmp.eq.s32.totalorder %s16, 1
    %p65 = por %p63, %p64
    %p67 = scmp.ne.s32.totalorder %s50, %s66
    %p68 = scmp.eq.s32.totalorder %s16, 0
    %p69 = por %p67, %p68
    %s71 = sadd.s32 %s70, 1
    %p74 = scmp.eq.s32.totalorder %s10, 1
    %p75 = scmp.ne.s32.totalorder %s70, %s72
    %p76 = scmp.eq.s32.totalorder %s10, 0
    %p77 = por %p75, %p76
    %p78 = scmp.ne.s32.totalorder %s70, %s72
    %p79 = scmp.eq.s32.totalorder %s15, 1
    %p80 = por %p78, %p79
    %p81 = scmp.ne.s32.totalorder %s72, %s73
    %p82 = scmp.eq.s32.totalorder %s15, 0
    %p83 = por %p81, %p82
    %p84 = scmp.ne.s32.totalorder %s72, %s73
    %p85 = scmp.eq.s32.totalorder %s16, 1
    %p86 = por %p84, %p85
    %p88 = scmp.ne.s32.totalorder %s73, %s87
    %p89 = scmp.eq.s32.totalorder %s16, 0
    %p90 = por %p88, %p89
    %s92 = sadd.s32 %s91, 1
    %p95 = scmp.eq.s32.totalorder %s10, 1
    %p96 = scmp.ne.s32.totalorder %s91, %s93
    %p97 = scmp.eq.s32.totalorder %s10, 0
    %p98 = por %p96, %p97
    %p99 = scmp.ne.s32.totalorder %s91, %s93
    %p100 = scmp.eq.s32.totalorder %s15, 1
    %p101 = por %p99, %p100
    %p102 = scmp.ne.s32.totalorder %s93, %s94
    %p103 = scmp.eq.s32.totalorder %s15, 0
    %p104 = por %p102, %p103
    %p105 = scmp.ne.s32.totalorder %s93, %s94
    %p106 = scmp.eq.s32.totalorder %s16, 1
    %p107 = por %p105, %p106
    %p109 = scmp.ne.s32.totalorder %s94, %s108
    %p110 = scmp.eq.s32.totalorder %s16, 0
    %p111 = por %p109, %p110
    %s112 = ssub.s32 %s10, %s17
    %p113 = scmp.eq.s32.totalorder %s112, 0
    %s115 = sadd.s32 %s114, 1
    %s116 = scalar_select %p113, %s114, %s115
    %p119 = pneg %p113
    %p120 = scmp.eq.s32.totalorder %s10, 1
    %p121 = por %p119, %p120
    %p122 = scmp.ne.s32.totalorder %s114, %s117
    %p123 = scmp.eq.s32.totalorder %s10, 0
    %p124 = por %p122, %p123
    %p125 = scmp.ne.s32.totalorder %s114, %s117
    %p126 = scmp.eq.s32.totalorder %s15, 1
    %p127 = por %p125, %p126
    %p128 = scmp.ne.s32.totalorder %s117, %s118
    %p129 = scmp.eq.s32.totalorder %s15, 0
    %p130 = por %p128, %p129
    %p131 = scmp.ne.s32.totalorder %s117, %s118
    %p132 = scmp.eq.s32.totalorder %s16, 1
    %p133 = por %p131, %p132
    %p135 = scmp.ne.s32.totalorder %s118, %s134
    %p136 = scmp.eq.s32.totalorder %s16, 0
    %p137 = por %p135, %p136
    %p138 = scmp.le.s32.totalorder 1, %s10
    %p139 = scmp.lt.s32.totalorder %s10, 3
    %p140 = pnand %p138, %p139
    %p141 = pneg %p140
    // Predicated region
    $region9: #{simple_cnn_forward.3} parent=5 // pred_check
      _
    $region10: #{simple_cnn_forward.3} parent=5 // pred_check_branch
      %143 = sbr.rel (%p140) target = $region12
    $region11: #{simple_cnn_forward.3} parent=5 // pred_region
      %s144 = ssub.s32 %s10, 1
      // Predicated region
      $region13: #{simple_cnn_forward.3} parent=11 // pred_check
        %p145 = pneg %p83
      $region14: #{simple_cnn_forward.3} parent=11 // pred_check_branch
        %147 = sbr.rel (%p145) target = $region16
      $region15: #{simple_cnn_forward.3} parent=11 // pred_region
        _
      $region16: #{simple_cnn_forward.3} parent=11 // pred_fallthru
        _
      // Predicated region
      $region17: #{simple_cnn_forward.3} parent=11 // pred_check
        %p148 = pneg %p104
      $region18: #{simple_cnn_forward.3} parent=11 // pred_check_branch
        %150 = sbr.rel (%p148) target = $region20
      $region19: #{simple_cnn_forward.3} parent=11 // pred_region
        _
      $region20: #{simple_cnn_forward.3} parent=11 // pred_fallthru
        _
    $region12: #{simple_cnn_forward.3} parent=5 // pred_fallthru
      _
    %p151 = scmp.lt.s32.totalorder %s10, 2
    // Predicated region
    $region21: #{simple_cnn_forward.3} parent=5 // pred_check
      %p152 = pneg %p151
    $region22: #{simple_cnn_forward.3} parent=5 // pred_check_branch
      %154 = sbr.rel (%p152) target = $region24
    $region23: #{simple_cnn_forward.3} parent=5 // pred_region
      // Predicated region
      $region25: #{simple_cnn_forward.3} parent=23 // pred_check
        %p155 = pneg %p30
      $region26: #{simple_cnn_forward.3} parent=23 // pred_check_branch
        %157 = sbr.rel (%p155) target = $region28
      $region27: #{simple_cnn_forward.3} parent=23 // pred_region
        %s158 = smul.u32 2, %s10
        %p159 = scmp.lt.s32.totalorder %s158, 3
        %s160 = scalar_select %p159, %s158, 3
        %s161 = smul.addr %s160, 4
        %s162 = smul.addr %s161, 4
        %s163 = scalar_lea.vmem %s0, %s162
        %s164 = smul.u32 2, %s10
      $region28: #{simple_cnn_forward.3} parent=23 // pred_fallthru
        _
      // Predicated region
      $region29: #{simple_cnn_forward.3} parent=23 // pred_check
        %p165 = pneg %p56
      $region30: #{simple_cnn_forward.3} parent=23 // pred_check_branch
        %167 = sbr.rel (%p165) target = $region32
      $region31: #{simple_cnn_forward.3} parent=23 // pred_region
        %s168 = smul.u32 2, %s10
        %p169 = scmp.lt.s32.totalorder %s168, 3
        %s170 = scalar_select %p169, %s168, 3
        %s171 = smul.addr %s170, 4
        %s172 = smul.addr %s171, 4
        %s173 = scalar_lea.vmem %s1, %s172
        %s174 = smul.u32 2, %s10
      $region32: #{simple_cnn_forward.3} parent=23 // pred_fallthru
        _
    $region24: #{simple_cnn_forward.3} parent=5 // pred_fallthru
      _
    %p175 = scmp.le.s32.totalorder 1, %s10
    %p176 = scmp.lt.s32.totalorder %s10, 3
    %p177 = pnand %p175, %p176
    %p178 = pneg %p177
    // Predicated region
    $region33: #{simple_cnn_forward.3} parent=5 // pred_check
      _
    $region34: #{simple_cnn_forward.3} parent=5 // pred_check_branch
      %180 = sbr.rel (%p177) target = $region36
    $region35: #{simple_cnn_forward.3} parent=5 // pred_region
      %s181 = ssub.s32 %s10, 1
      %s182 = smul.u32 2, %s15
      %p183 = scmp.lt.s32.totalorder %s182, 3
      %s184 = scalar_select %p183, %s182, 3
      %s185 = smul.addr %s184, 4
      %s186 = smul.addr %s185, 4
      %s187 = scalar_lea.vmem %s0, %s186
      %p188 = pneg %p36
      %p189 = pneg %p33
      %s190 = smul.u32 2, %s15
      %p191 = scmp.lt.s32.totalorder %s190, 3
      %s192 = scalar_select %p191, %s190, 3
      %s193 = smul.addr %s192, 4
      %s194 = smul.addr %s193, 4
      %s195 = scalar_lea.vmem %s1, %s194
      %p196 = pneg %p62
      %p197 = pneg %p59
      %p198 = pneg %p83
      %p199 = pneg %p80
      %p200 = pneg %p104
      %p201 = pneg %p101
      %p202 = pneg %p130
      %p203 = pneg %p127
      %s204 = smul.u32 2, %s15
      %p205 = scmp.lt.s32.totalorder %s204, 3
      %s206 = scalar_select %p205, %s204, 3
      %s207 = smul.addr %s206, 4
      %s208 = scalar_lea.vmem %s4, %s207
      %s209 = smul.u32 2, %s15
      %p210 = scmp.lt.s32.totalorder %s209, 3
      %s211 = scalar_select %p210, %s209, 3
      %s212 = smul.addr %s211, 4
      %s213 = smul.addr %s212, 4
      %s214 = scalar_lea.vmem %s0, %s213
      %s215 = smul.u32 2, %s15
      %s216 = smul.u32 2, %s15
      %p217 = scmp.lt.s32.totalorder %s216, 3
      %s218 = scalar_select %p217, %s216, 3
      %s219 = smul.addr %s218, 4
      %s220 = smul.addr %s219, 4
      %s221 = scalar_lea.vmem %s1, %s220
      %s222 = smul.u32 2, %s15
      %s223 = smul.u32 2, %s15
      %p224 = scmp.lt.s32.totalorder %s223, 3
      %s225 = scalar_select %p224, %s223, 3
      %s226 = smul.addr %s225, 4
      %s227 = scalar_lea.vmem %s4, %s226
      %s228 = smul.u32 2, %s15
      %v230 = vld [vmem:[%s2] sm:$0xff]
      %v231 = vld [vmem:[%s2 + $0x8] sm:$0xff]
      %v232 = vld [vmem:[%s2 + $0x10] sm:$0xff]
      %v233 = vld [vmem:[%s2 + $0x18] sm:$0xff]
      %v234 = vld [vmem:[%s2 + $0x20] sm:$0xff]
      %v235 = vld [vmem:[%s2 + $0x28] sm:$0xff]
      %v236 = vld [vmem:[%s2 + $0x30] sm:$0xff]
      %v237 = vld [vmem:[%s2 + $0x38] sm:$0xff]
      %v238 = vld [vmem:[%s2 + $0x40] sm:$0xff]
      %v239 = vld [vmem:[%s2 + $0x48] sm:$0xff]
      %v240 = vld [vmem:[%s2 + $0x50] sm:$0xff]
      %v241 = vld [vmem:[%s2 + $0x58] sm:$0xff]
      %v242 = vld [vmem:[%s2 + $0x60] sm:$0xff]
      %v243 = vld [vmem:[%s2 + $0x68] sm:$0xff]
      %v244 = vld [vmem:[%s2 + $0x70] sm:$0xff]
      %v245 = vld [vmem:[%s2 + $0x78] sm:$0xff]
      %v246 = vld [vmem:[%s2 + $0x80] sm:$0xff]
      %v247 = vld [vmem:[%s2 + $0x88] sm:$0xff]
      %v248 = vld [vmem:[%s2 + $0x90] sm:$0xff]
      %v249 = vld [vmem:[%s2 + $0x98] sm:$0xff]
      %v250 = vld [vmem:[%s2 + $0xa0] sm:$0xff]
      %v251 = vld [vmem:[%s2 + $0xa8] sm:$0xff]
      %v252 = vld [vmem:[%s2 + $0xb0] sm:$0xff]
      %v253 = vld [vmem:[%s2 + $0xb8] sm:$0xff]
      %v254 = vld [vmem:[%s2 + $0xc0] sm:$0xff]
      %v255 = vld [vmem:[%s2 + $0xc8] sm:$0xff]
      %v256 = vld [vmem:[%s2 + $0xd0] sm:$0xff]
      %v257 = vld [vmem:[%s2 + $0xd8] sm:$0xff]
      %v258 = vld [vmem:[%s2 + $0xe0] sm:$0xff]
      %v259 = vld [vmem:[%s2 + $0xe8] sm:$0xff]
      %v260 = vld [vmem:[%s2 + $0xf0] sm:$0xff]
      %v261 = vld [vmem:[%s2 + $0xf8] sm:$0xff]
      %v262 = vld [vmem:[%s2 + $0x100] sm:$0xff]
      %v263 = vld [vmem:[%s2 + $0x108] sm:$0xff]
      %v264 = vld [vmem:[%s2 + $0x110] sm:$0xff]
      %v265 = vld [vmem:[%s2 + $0x118] sm:$0xff]
      %v266 = vld [vmem:[%s2 + $0x120] sm:$0xff]
      %v267 = vld [vmem:[%s2 + $0x128] sm:$0xff]
      %v268 = vld [vmem:[%s2 + $0x130] sm:$0xff]
      %v269 = vld [vmem:[%s2 + $0x138] sm:$0xff]
      %v270 = vld [vmem:[%s2 + $0x140] sm:$0xff]
      %v271 = vld [vmem:[%s2 + $0x148] sm:$0xff]
      %v272 = vld [vmem:[%s2 + $0x150] sm:$0xff]
      %v273 = vld [vmem:[%s2 + $0x158] sm:$0xff]
      %v274 = vld [vmem:[%s2 + $0x160] sm:$0xff]
      %v275 = vld [vmem:[%s2 + $0x168] sm:$0xff]
      %v276 = vld [vmem:[%s2 + $0x170] sm:$0xff]
      %v277 = vld [vmem:[%s2 + $0x178] sm:$0xff]
      %v278 = vld [vmem:[%s2 + $0x180] sm:$0xff]
      %v279 = vld [vmem:[%s2 + $0x188] sm:$0xff]
      %v280 = vld [vmem:[%s2 + $0x190] sm:$0xff]
      %v281 = vld [vmem:[%s2 + $0x198] sm:$0xff]
      %v282 = vld [vmem:[%s2 + $0x1a0] sm:$0xff]
      %v283 = vld [vmem:[%s2 + $0x1a8] sm:$0xff]
      %v284 = vld [vmem:[%s2 + $0x1b0] sm:$0xff]
      %v285 = vld [vmem:[%s2 + $0x1b8] sm:$0xff]
      %v286 = vld [vmem:[%s2 + $0x1c0] sm:$0xff]
      %v287 = vld [vmem:[%s2 + $0x1c8] sm:$0xff]
      %v288 = vld [vmem:[%s2 + $0x1d0] sm:$0xff]
      %v289 = vld [vmem:[%s2 + $0x1d8] sm:$0xff]
      %v290 = vld [vmem:[%s214] sm:$0xff]
      %v291 = vld [vmem:[%s214 + $0x8] sm:$0xff]
      %v292 = vld [vmem:[%s214 + $0x10] sm:$0xff]
      %v293 = vld [vmem:[%s214 + $0x18] sm:$0xff]
      %v298 = vunpack.c.l.b16 %v290
      %v299 = vunpack.c.h.b16 %v290
      %v300 = vunpack.c.l.b16 %v291
      %v301 = vunpack.c.h.b16 %v291
      %v302 = vunpack.c.l.b16 %v292
      %v303 = vunpack.c.h.b16 %v292
      %v304 = vunpack.c.l.b16 %v293
      %v305 = vunpack.c.h.b16 %v293
      %v306 = vpack.c.b16 %v302, %v298
      %v307 = vpack.c.b16 %v303, %v299
      %v308 = vpack.c.b16 %v304, %v300
      %v309 = vpack.c.b16 %v305, %v301
      %v373 = vunpack.c.l.b16 %v230
      %v374 = vunpack.c.h.b16 %v230
      %v375 = vunpack.c.l.b16 %v231
      %v376 = vunpack.c.h.b16 %v231
      %v377 = vunpack.c.l.b16 %v232
      %v378 = vunpack.c.h.b16 %v232
      %v379 = vunpack.c.l.b16 %v233
      %v380 = vunpack.c.h.b16 %v233
      %v381 = vunpack.c.l.b16 %v234
      %v382 = vunpack.c.h.b16 %v234
      %v383 = vunpack.c.l.b16 %v235
      %v384 = vunpack.c.h.b16 %v235
      %v385 = vunpack.c.l.b16 %v236
      %v386 = vunpack.c.h.b16 %v236
      %v387 = vunpack.c.l.b16 %v237
      %v388 = vunpack.c.h.b16 %v237
      %v389 = vunpack.c.l.b16 %v238
      %v390 = vunpack.c.h.b16 %v238
      %v391 = vunpack.c.l.b16 %v239
      %v392 = vunpack.c.h.b16 %v239
      %v393 = vunpack.c.l.b16 %v240
      %v394 = vunpack.c.h.b16 %v240
      %v395 = vunpack.c.l.b16 %v241
      %v396 = vunpack.c.h.b16 %v241
      %v397 = vunpack.c.l.b16 %v242
      %v398 = vunpack.c.h.b16 %v242
      %v399 = vunpack.c.l.b16 %v243
      %v400 = vunpack.c.h.b16 %v243
      %v401 = vunpack.c.l.b16 %v244
      %v402 = vunpack.c.h.b16 %v244
      %v403 = vunpack.c.l.b16 %v245
      %v404 = vunpack.c.h.b16 %v245
      %v405 = vunpack.c.l.b16 %v246
      %v406 = vunpack.c.h.b16 %v246
      %v407 = vunpack.c.l.b16 %v247
      %v408 = vunpack.c.h.b16 %v247
      %v409 = vunpack.c.l.b16 %v248
      %v410 = vunpack.c.h.b16 %v248
      %v411 = vunpack.c.l.b16 %v249
      %v412 = vunpack.c.h.b16 %v249
      %v413 = vunpack.c.l.b16 %v250
      %v414 = vunpack.c.h.b16 %v250
      %v415 = vunpack.c.l.b16 %v251
      %v416 = vunpack.c.h.b16 %v251
      %v417 = vunpack.c.l.b16 %v252
      %v418 = vunpack.c.h.b16 %v252
      %v419 = vunpack.c.l.b16 %v253
      %v420 = vunpack.c.h.b16 %v253
      %v421 = vunpack.c.l.b16 %v254
      %v422 = vunpack.c.h.b16 %v254
      %v423 = vunpack.c.l.b16 %v255
      %v424 = vunpack.c.h.b16 %v255
      %v425 = vunpack.c.l.b16 %v256
      %v426 = vunpack.c.h.b16 %v256
      %v427 = vunpack.c.l.b16 %v257
      %v428 = vunpack.c.h.b16 %v257
      %v429 = vunpack.c.l.b16 %v258
      %v430 = vunpack.c.h.b16 %v258
      %v431 = vunpack.c.l.b16 %v259
      %v432 = vunpack.c.h.b16 %v259
      %v433 = vunpack.c.l.b16 %v260
      %v434 = vunpack.c.h.b16 %v260
      %v435 = vunpack.c.l.b16 %v261
      %v436 = vunpack.c.h.b16 %v261
      %v437 = vunpack.c.l.b16 %v262
      %v438 = vunpack.c.h.b16 %v262
      %v439 = vunpack.c.l.b16 %v263
      %v440 = vunpack.c.h.b16 %v263
      %v441 = vunpack.c.l.b16 %v264
      %v442 = vunpack.c.h.b16 %v264
      %v443 = vunpack.c.l.b16 %v265
      %v444 = vunpack.c.h.b16 %v265
      %v445 = vunpack.c.l.b16 %v266
      %v446 = vunpack.c.h.b16 %v266
      %v447 = vunpack.c.l.b16 %v267
      %v448 = vunpack.c.h.b16 %v267
      %v449 = vunpack.c.l.b16 %v268
      %v450 = vunpack.c.h.b16 %v268
      %v451 = vunpack.c.l.b16 %v269
      %v452 = vunpack.c.h.b16 %v269
      %v453 = vunpack.c.l.b16 %v270
      %v454 = vunpack.c.h.b16 %v270
      %v455 = vunpack.c.l.b16 %v271
      %v456 = vunpack.c.h.b16 %v271
      %v457 = vunpack.c.l.b16 %v272
      %v458 = vunpack.c.h.b16 %v272
      %v459 = vunpack.c.l.b16 %v273
      %v460 = vunpack.c.h.b16 %v273
      %v461 = vunpack.c.l.b16 %v274
      %v462 = vunpack.c.h.b16 %v274
      %v463 = vunpack.c.l.b16 %v275
      %v464 = vunpack.c.h.b16 %v275
      %v465 = vunpack.c.l.b16 %v276
      %v466 = vunpack.c.h.b16 %v276
      %v467 = vunpack.c.l.b16 %v277
      %v468 = vunpack.c.h.b16 %v277
      %v469 = vunpack.c.l.b16 %v278
      %v470 = vunpack.c.h.b16 %v278
      %v471 = vunpack.c.l.b16 %v279
      %v472 = vunpack.c.h.b16 %v279
      %v473 = vunpack.c.l.b16 %v280
      %v474 = vunpack.c.h.b16 %v280
      %v475 = vunpack.c.l.b16 %v281
      %v476 = vunpack.c.h.b16 %v281
      %v477 = vunpack.c.l.b16 %v282
      %v478 = vunpack.c.h.b16 %v282
      %v479 = vunpack.c.l.b16 %v283
      %v480 = vunpack.c.h.b16 %v283
      %v481 = vunpack.c.l.b16 %v284
      %v482 = vunpack.c.h.b16 %v284
      %v483 = vunpack.c.l.b16 %v285
      %v484 = vunpack.c.h.b16 %v285
      %v485 = vunpack.c.l.b16 %v286
      %v486 = vunpack.c.h.b16 %v286
      %v487 = vunpack.c.l.b16 %v287
      %v488 = vunpack.c.h.b16 %v287
      %v489 = vunpack.c.l.b16 %v288
      %v490 = vunpack.c.h.b16 %v288
      %v491 = vunpack.c.l.b16 %v289
      %v492 = vunpack.c.h.b16 %v289
      %v493 = vpack.c.b16 %v375, %v373
      %v494 = vpack.c.b16 %v376, %v374
      %v495 = vpack.c.b16 %v379, %v377
      %v496 = vpack.c.b16 %v380, %v378
      %v497 = vpack.c.b16 %v383, %v381
      %v498 = vpack.c.b16 %v384, %v382
      %v499 = vpack.c.b16 %v387, %v385
      %v500 = vpack.c.b16 %v388, %v386
      %v501 = vpack.c.b16 %v391, %v389
      %v502 = vpack.c.b16 %v392, %v390
      %v503 = vpack.c.b16 %v395, %v393
      %v504 = vpack.c.b16 %v396, %v394
      %v505 = vpack.c.b16 %v399, %v397
      %v506 = vpack.c.b16 %v400, %v398
      %v507 = vpack.c.b16 %v403, %v401
      %v508 = vpack.c.b16 %v404, %v402
      %v509 = vpack.c.b16 %v407, %v405
      %v510 = vpack.c.b16 %v408, %v406
      %v511 = vpack.c.b16 %v411, %v409
      %v512 = vpack.c.b16 %v412, %v410
      %v513 = vpack.c.b16 %v415, %v413
      %v514 = vpack.c.b16 %v416, %v414
      %v515 = vpack.c.b16 %v419, %v417
      %v516 = vpack.c.b16 %v420, %v418
      %v517 = vpack.c.b16 %v423, %v421
      %v518 = vpack.c.b16 %v424, %v422
      %v519 = vpack.c.b16 %v427, %v425
      %v520 = vpack.c.b16 %v428, %v426
      %v521 = vpack.c.b16 %v431, %v429
      %v522 = vpack.c.b16 %v432, %v430
      %v523 = vpack.c.b16 %v435, %v433
      %v524 = vpack.c.b16 %v436, %v434
      %v525 = vpack.c.b16 %v439, %v437
      %v526 = vpack.c.b16 %v440, %v438
      %v527 = vpack.c.b16 %v443, %v441
      %v528 = vpack.c.b16 %v444, %v442
      %v529 = vpack.c.b16 %v447, %v445
      %v530 = vpack.c.b16 %v448, %v446
      %v531 = vpack.c.b16 %v451, %v449
      %v532 = vpack.c.b16 %v452, %v450
      %v533 = vpack.c.b16 %v455, %v453
      %v534 = vpack.c.b16 %v456, %v454
      %v535 = vpack.c.b16 %v459, %v457
      %v536 = vpack.c.b16 %v460, %v458
      %v537 = vpack.c.b16 %v463, %v461
      %v538 = vpack.c.b16 %v464, %v462
      %v539 = vpack.c.b16 %v467, %v465
      %v540 = vpack.c.b16 %v468, %v466
      %v541 = vpack.c.b16 %v471, %v469
      %v542 = vpack.c.b16 %v472, %v470
      %v543 = vpack.c.b16 %v475, %v473
      %v544 = vpack.c.b16 %v476, %v474
      %v545 = vpack.c.b16 %v479, %v477
      %v546 = vpack.c.b16 %v480, %v478
      %v547 = vpack.c.b16 %v483, %v481
      %v548 = vpack.c.b16 %v484, %v482
      %v549 = vpack.c.b16 %v487, %v485
      %v550 = vpack.c.b16 %v488, %v486
      %v551 = vpack.c.b16 %v491, %v489
      %v552 = vpack.c.b16 %v492, %v490
      %vm613 = vcmask 785408
      %v615 = vsel %vm613, %v309, 0
      %617 = vmatpush.bf16.msra.mxu0 %v507
      %618 = vmatpush.bf16.msra.mxu0 %v505
      %619 = vmatpush.bf16.msra.mxu0 %v503
      %620 = vmatpush.bf16.msra.mxu0 %v501
      %621 = vmatpush.bf16.msra.mxu0 %v499
      %622 = vmatpush.bf16.msra.mxu0 %v497
      %623 = vmatpush.bf16.msra.mxu0 %v495
      %624 = vmatpush.bf16.msra.mxu0 %v493
      %625 = vmatmul.bf16.gmra.mxu0 %v306
      %v626 = vpop.f32.mrf.mxu0
      %v627 = vadd.f32 0.0, %v626
      %v628 = vpop.f32.mrf.mxu0
      %v629 = vadd.f32 0.0, %v628
      %630 = vdwg.mxu0
      %631 = vmatpush.bf16.msra.mxu0 %v523
      %632 = vmatpush.bf16.msra.mxu0 %v521
      %633 = vmatpush.bf16.msra.mxu0 %v519
      %634 = vmatpush.bf16.msra.mxu0 %v517
      %635 = vmatpush.bf16.msra.mxu0 %v515
      %636 = vmatpush.bf16.msra.mxu0 %v513
      %637 = vmatpush.bf16.msra.mxu0 %v511
      %638 = vmatpush.bf16.msra.mxu0 %v509
      %639 = vmatmul.bf16.gmra.mxu0 %v307
      %v640 = vpop.f32.mrf.mxu0
      %v641 = vadd.f32 %v627, %v640
      %v642 = vpop.f32.mrf.mxu0
      %v643 = vadd.f32 %v629, %v642
      %644 = vdwg.mxu0
      %645 = vmatpush.bf16.msra.mxu0 %v539
      %646 = vmatpush.bf16.msra.mxu0 %v537
      %647 = vmatpush.bf16.msra.mxu0 %v535
      %648 = vmatpush.bf16.msra.mxu0 %v533
      %649 = vmatpush.bf16.msra.mxu0 %v531
      %650 = vmatpush.bf16.msra.mxu0 %v529
      %651 = vmatpush.bf16.msra.mxu0 %v527
      %652 = vmatpush.bf16.msra.mxu0 %v525
      %653 = vmatmul.bf16.gmra.mxu0 %v308
      %v654 = vpop.f32.mrf.mxu0
      %v655 = vadd.f32 %v641, %v654
      %v656 = vpop.f32.mrf.mxu0
      %v657 = vadd.f32 %v643, %v656
      %658 = vdwg.mxu0
      %659 = vmatpush.bf16.msra.mxu0 0
      %660 = vmatpush.bf16.msra.mxu0 0
      %661 = vmatpush.bf16.msra.mxu0 %v551
      %662 = vmatpush.bf16.msra.mxu0 %v549
      %663 = vmatpush.bf16.msra.mxu0 %v547
      %664 = vmatpush.bf16.msra.mxu0 %v545
      %665 = vmatpush.bf16.msra.mxu0 %v543
      %666 = vmatpush.bf16.msra.mxu0 %v541
      %667 = vmatmul.bf16.gmra.mxu0 %v615
      %v668 = vpop.f32.mrf.mxu0
      %v669 = vadd.f32 %v655, %v668
      %v670 = vpop.f32.mrf.mxu0
      %v671 = vadd.f32 %v657, %v670
      %672 = vdwg.mxu0
      %673 = vmatpush.bf16.msra.mxu0 %v508
      %674 = vmatpush.bf16.msra.mxu0 %v506
      %675 = vmatpush.bf16.msra.mxu0 %v504
      %676 = vmatpush.bf16.msra.mxu0 %v502
      %677 = vmatpush.bf16.msra.mxu0 %v500
      %678 = vmatpush.bf16.msra.mxu0 %v498
      %679 = vmatpush.bf16.msra.mxu0 %v496
      %680 = vmatpush.bf16.msra.mxu0 %v494
      %681 = vmatmul.bf16.gmra.mxu0 %v306
      %v682 = vpop.f32.mrf.mxu0
      %v683 = vadd.f32 0.0, %v682
      %v684 = vpop.f32.mrf.mxu0
      %v685 = vadd.f32 0.0, %v684
      %686 = vdwg.mxu0
      %687 = vmatpush.bf16.msra.mxu0 %v524
      %688 = vmatpush.bf16.msra.mxu0 %v522
      %689 = vmatpush.bf16.msra.mxu0 %v520
      %690 = vmatpush.bf16.msra.mxu0 %v518
      %691 = vmatpush.bf16.msra.mxu0 %v516
      %692 = vmatpush.bf16.msra.mxu0 %v514
      %693 = vmatpush.bf16.msra.mxu0 %v512
      %694 = vmatpush.bf16.msra.mxu0 %v510
      %695 = vmatmul.bf16.gmra.mxu0 %v307
      %v696 = vpop.f32.mrf.mxu0
      %v697 = vadd.f32 %v683, %v696
      %v698 = vpop.f32.mrf.mxu0
      %v699 = vadd.f32 %v685, %v698
      %700 = vdwg.mxu0
      %701 = vmatpush.bf16.msra.mxu0 %v540
      %702 = vmatpush.bf16.msra.mxu0 %v538
      %703 = vmatpush.bf16.msra.mxu0 %v536
      %704 = vmatpush.bf16.msra.mxu0 %v534
      %705 = vmatpush.bf16.msra.mxu0 %v532
      %706 = vmatpush.bf16.msra.mxu0 %v530
      %707 = vmatpush.bf16.msra.mxu0 %v528
      %708 = vmatpush.bf16.msra.mxu0 %v526
      %709 = vmatmul.bf16.gmra.mxu0 %v308
      %v710 = vpop.f32.mrf.mxu0
      %v711 = vadd.f32 %v697, %v710
      %v712 = vpop.f32.mrf.mxu0
      %v713 = vadd.f32 %v699, %v712
      %714 = vdwg.mxu0
      %715 = vmatpush.bf16.msra.mxu0 0
      %716 = vmatpush.bf16.msra.mxu0 0
      %717 = vmatpush.bf16.msra.mxu0 %v552
      %718 = vmatpush.bf16.msra.mxu0 %v550
      %719 = vmatpush.bf16.msra.mxu0 %v548
      %720 = vmatpush.bf16.msra.mxu0 %v546
      %721 = vmatpush.bf16.msra.mxu0 %v544
      %722 = vmatpush.bf16.msra.mxu0 %v542
      %723 = vmatmul.bf16.gmra.mxu0 %v615
      %v724 = vpop.f32.mrf.mxu0
      %v725 = vadd.f32 %v711, %v724
      %v726 = vpop.f32.mrf.mxu0
      %v727 = vadd.f32 %v713, %v726
      %728 = vdwg.mxu0
      %v729 = vld [vmem:[%s221] sm:$0xff]
      %v730 = vld [vmem:[%s221 + $0x8] sm:$0xff]
      %v731 = vld [vmem:[%s221 + $0x10] sm:$0xff]
      %v732 = vld [vmem:[%s221 + $0x18] sm:$0xff]
      %v737 = vunpack.c.l.b16 %v729
      %v738 = vunpack.c.h.b16 %v729
      %v739 = vunpack.c.l.b16 %v730
      %v740 = vunpack.c.h.b16 %v730
      %v741 = vunpack.c.l.b16 %v731
      %v742 = vunpack.c.h.b16 %v731
      %v743 = vunpack.c.l.b16 %v732
      %v744 = vunpack.c.h.b16 %v732
      %v745 = vpack.c.b16 %v741, %v737
      %v746 = vpack.c.b16 %v742, %v738
      %v747 = vpack.c.b16 %v743, %v739
      %v748 = vpack.c.b16 %v744, %v740
      %v753 = vsel %vm613, %v748, 0
      %755 = vmatpush.bf16.msra.mxu0 %v507
      %756 = vmatpush.bf16.msra.mxu0 %v505
      %757 = vmatpush.bf16.msra.mxu0 %v503
      %758 = vmatpush.bf16.msra.mxu0 %v501
      %759 = vmatpush.bf16.msra.mxu0 %v499
      %760 = vmatpush.bf16.msra.mxu0 %v497
      %761 = vmatpush.bf16.msra.mxu0 %v495
      %762 = vmatpush.bf16.msra.mxu0 %v493
      %763 = vmatmul.bf16.gmra.mxu0 %v745
      %v764 = vpop.f32.mrf.mxu0
      %v765 = vadd.f32 0.0, %v764
      %v766 = vpop.f32.mrf.mxu0
      %v767 = vadd.f32 0.0, %v766
      %768 = vdwg.mxu0
      %769 = vmatpush.bf16.msra.mxu0 %v523
      %770 = vmatpush.bf16.msra.mxu0 %v521
      %771 = vmatpush.bf16.msra.mxu0 %v519
      %772 = vmatpush.bf16.msra.mxu0 %v517
      %773 = vmatpush.bf16.msra.mxu0 %v515
      %774 = vmatpush.bf16.msra.mxu0 %v513
      %775 = vmatpush.bf16.msra.mxu0 %v511
      %776 = vmatpush.bf16.msra.mxu0 %v509
      %777 = vmatmul.bf16.gmra.mxu0 %v746
      %v778 = vpop.f32.mrf.mxu0
      %v779 = vadd.f32 %v765, %v778
      %v780 = vpop.f32.mrf.mxu0
      %v781 = vadd.f32 %v767, %v780
      %782 = vdwg.mxu0
      %783 = vmatpush.bf16.msra.mxu0 %v539
      %784 = vmatpush.bf16.msra.mxu0 %v537
      %785 = vmatpush.bf16.msra.mxu0 %v535
      %786 = vmatpush.bf16.msra.mxu0 %v533
      %787 = vmatpush.bf16.msra.mxu0 %v531
      %788 = vmatpush.bf16.msra.mxu0 %v529
      %789 = vmatpush.bf16.msra.mxu0 %v527
      %790 = vmatpush.bf16.msra.mxu0 %v525
      %791 = vmatmul.bf16.gmra.mxu0 %v747
      %v792 = vpop.f32.mrf.mxu0
      %v793 = vadd.f32 %v779, %v792
      %v794 = vpop.f32.mrf.mxu0
      %v795 = vadd.f32 %v781, %v794
      %796 = vdwg.mxu0
      %797 = vmatpush.bf16.msra.mxu0 0
      %798 = vmatpush.bf16.msra.mxu0 0
      %799 = vmatpush.bf16.msra.mxu0 %v551
      %800 = vmatpush.bf16.msra.mxu0 %v549
      %801 = vmatpush.bf16.msra.mxu0 %v547
      %802 = vmatpush.bf16.msra.mxu0 %v545
      %803 = vmatpush.bf16.msra.mxu0 %v543
      %804 = vmatpush.bf16.msra.mxu0 %v541
      %805 = vmatmul.bf16.gmra.mxu0 %v753
      %v806 = vpop.f32.mrf.mxu0
      %v807 = vadd.f32 %v793, %v806
      %v808 = vpop.f32.mrf.mxu0
      %v809 = vadd.f32 %v795, %v808
      %810 = vdwg.mxu0
      %811 = vmatpush.bf16.msra.mxu0 %v508
      %812 = vmatpush.bf16.msra.mxu0 %v506
      %813 = vmatpush.bf16.msra.mxu0 %v504
      %814 = vmatpush.bf16.msra.mxu0 %v502
      %815 = vmatpush.bf16.msra.mxu0 %v500
      %816 = vmatpush.bf16.msra.mxu0 %v498
      %817 = vmatpush.bf16.msra.mxu0 %v496
      %818 = vmatpush.bf16.msra.mxu0 %v494
      %819 = vmatmul.bf16.gmra.mxu0 %v745
      %v820 = vpop.f32.mrf.mxu0
      %v821 = vadd.f32 0.0, %v820
      %v822 = vpop.f32.mrf.mxu0
      %v823 = vadd.f32 0.0, %v822
      %824 = vdwg.mxu0
      %825 = vmatpush.bf16.msra.mxu0 %v524
      %826 = vmatpush.bf16.msra.mxu0 %v522
      %827 = vmatpush.bf16.msra.mxu0 %v520
      %828 = vmatpush.bf16.msra.mxu0 %v518
      %829 = vmatpush.bf16.msra.mxu0 %v516
      %830 = vmatpush.bf16.msra.mxu0 %v514
      %831 = vmatpush.bf16.msra.mxu0 %v512
      %832 = vmatpush.bf16.msra.mxu0 %v510
      %833 = vmatmul.bf16.gmra.mxu0 %v746
      %v834 = vpop.f32.mrf.mxu0
      %v835 = vadd.f32 %v821, %v834
      %v836 = vpop.f32.mrf.mxu0
      %v837 = vadd.f32 %v823, %v836
      %838 = vdwg.mxu0
      %839 = vmatpush.bf16.msra.mxu0 %v540
      %840 = vmatpush.bf16.msra.mxu0 %v538
      %841 = vmatpush.bf16.msra.mxu0 %v536
      %842 = vmatpush.bf16.msra.mxu0 %v534
      %843 = vmatpush.bf16.msra.mxu0 %v532
      %844 = vmatpush.bf16.msra.mxu0 %v530
      %845 = vmatpush.bf16.msra.mxu0 %v528
      %846 = vmatpush.bf16.msra.mxu0 %v526
      %847 = vmatmul.bf16.gmra.mxu0 %v747
      %v848 = vpop.f32.mrf.mxu0
      %v849 = vadd.f32 %v835, %v848
      %v850 = vpop.f32.mrf.mxu0
      %v851 = vadd.f32 %v837, %v850
      %852 = vdwg.mxu0
      %853 = vmatpush.bf16.msra.mxu0 0
      %854 = vmatpush.bf16.msra.mxu0 0
      %855 = vmatpush.bf16.msra.mxu0 %v552
      %856 = vmatpush.bf16.msra.mxu0 %v550
      %857 = vmatpush.bf16.msra.mxu0 %v548
      %858 = vmatpush.bf16.msra.mxu0 %v546
      %859 = vmatpush.bf16.msra.mxu0 %v544
      %860 = vmatpush.bf16.msra.mxu0 %v542
      %861 = vmatmul.bf16.gmra.mxu0 %v753
      %v862 = vpop.f32.mrf.mxu0
      %v863 = vadd.f32 %v849, %v862
      %v864 = vpop.f32.mrf.mxu0
      %v865 = vadd.f32 %v851, %v864
      %866 = vdwg.mxu0
      %v867 = vmax.f32 %v669, %v725
      %v868 = vmax.f32 %v671, %v727
      %v869 = vmax.f32 %v807, %v863
      %v870 = vmax.f32 %v809, %v865
      %v871 = vmax.f32 %v867, %v869
      %v872 = vmax.f32 %v868, %v870
      %v873 = vld [vmem:[%s3] sm:$0x1]
      %v875 = vperm.slane %v873, 0
      %v877 = vadd.f32 %v871, %v875
      %v878 = vadd.f32 %v872, %v875
      %v879 = vmax.f32 %v877, 0.0
      %v880 = vmax.f32 %v878, 0.0
      %v881 = vpack.c.bf16 %v879, %v879
      %v882 = vpack.c.bf16 %v880, %v880
      %883 = vst [vmem:[%s227] sm:$0xf] %v881
      %884 = vst [vmem:[%s227 + $0x4] sm:$0xf] %v882
      %s885 = smul.u32 2, %s15
      %p886 = scmp.lt.s32.totalorder %s885, 3
      %s887 = scalar_select %p886, %s885, 3
      %s888 = smul.addr %s887, 4
      %s889 = scalar_lea.vmem %s4, %s888
      // Predicated region
      $region37: #{simple_cnn_forward.3} parent=35 // pred_check
        %p890 = pneg %p127
      $region38: #{simple_cnn_forward.3} parent=35 // pred_check_branch
        %892 = sbr.rel (%p890) target = $region40
      $region39: #{simple_cnn_forward.3} parent=35 // pred_region
        %s893 = smul.u32 2, %s15
      $region40: #{simple_cnn_forward.3} parent=35 // pred_fallthru
        _
    $region36: #{simple_cnn_forward.3} parent=5 // pred_fallthru
      _
    %p894 = scmp.le.s32.totalorder 2, %s10
    // Predicated region
    $region41: #{simple_cnn_forward.3} parent=5 // pred_check
      %p895 = pneg %p894
    $region42: #{simple_cnn_forward.3} parent=5 // pred_check_branch
      %897 = sbr.rel (%p895) target = $region44
    $region43: #{simple_cnn_forward.3} parent=5 // pred_region
      %s898 = ssub.s32 %s10, 2
      // Predicated region
      $region45: #{simple_cnn_forward.3} parent=43 // pred_check
        %p899 = pneg %p133
      $region46: #{simple_cnn_forward.3} parent=43 // pred_check_branch
        %901 = sbr.rel (%p899) target = $region48
      $region47: #{simple_cnn_forward.3} parent=43 // pred_region
        %s902 = smul.u32 2, %s16
        %p903 = scmp.lt.s32.totalorder %s902, 3
        %s904 = scalar_select %p903, %s902, 3
        %s905 = smul.addr %s904, 4
        %s906 = scalar_lea.vmem %s4, %s905
      $region48: #{simple_cnn_forward.3} parent=43 // pred_fallthru
        _
    $region44: #{simple_cnn_forward.3} parent=5 // pred_fallthru
      _
  $region6: #{simple_cnn_forward.3} parent=0 // loop_footer
    %s14 = sadd.s32 1, %s10
  $region7: #{simple_cnn_forward.3} parent=0 // loop_footer_branch
    %9 = sbr.rel target = $region3
  $region8: #{simple_cnn_forward.3} parent=0 // loop_exit
    _

// kernel: simple_cnn_forward.4
$region0: #{simple_cnn_forward.4}
  #allocation0 [shape = 'u32[]', space=smem, size = 0x4, offset = 0x4, fixed_abs, tag = 'smem constant byte address 0x4 - core index']
  #allocation1 [shape = 'u32[72,128]{1,0:T(1,128)}', space=vmem, size = 0x9000, scoped, tag = 'internal scratch']
  %s0 = inlined_call_operand.vmem [shape: bf16[16,420], index: 0, kind: input, shape index: {}]
  %s1 = inlined_call_operand.vmem [shape: bf16[16,420], index: 1, kind: input, shape index: {}]
  %s2 = inlined_call_operand.vmem [shape: bf16[420,256], index: 2, kind: input, shape index: {}]
  %s3 = inlined_call_operand.vmem [shape: f32[1,128], index: 3, kind: input, shape index: {}]
  %s4 = inlined_call_operand.vmem [shape: bf16[16,128], index: 4, kind: output, shape index: {}]
  %s5 = sld [smem:[#allocation0]]
  $region26: #{simple_cnn_forward.4} parent=0
    _
  %s7 = ssub.s32 1, %s5
  %s8 = scalar_select 0, %s7, %s5
  // Predicated region
  $region2: #{simple_cnn_forward.4} parent=0 // pred_check
    _
  $region3: #{simple_cnn_forward.4} parent=0 // pred_check_branch
    %10 = sbr.rel (0) target = $region5
  $region4: #{simple_cnn_forward.4} parent=0 // pred_region
    _
  $region5: #{simple_cnn_forward.4} parent=0 // pred_fallthru
    _
  // Predicated region
  $region6: #{simple_cnn_forward.4} parent=0 // pred_check
    _
  $region7: #{simple_cnn_forward.4} parent=0 // pred_check_branch
    %12 = sbr.rel (0) target = $region9
  $region8: #{simple_cnn_forward.4} parent=0 // pred_region
    _
  $region9: #{simple_cnn_forward.4} parent=0 // pred_fallthru
    _
  // Predicated region
  $region10: #{simple_cnn_forward.4} parent=0 // pred_check
    _
  $region11: #{simple_cnn_forward.4} parent=0 // pred_check_branch
    %14 = sbr.rel (0) target = $region13
  $region12: #{simple_cnn_forward.4} parent=0 // pred_region
    _
  $region13: #{simple_cnn_forward.4} parent=0 // pred_fallthru
    _
  // Predicated region
  $region14: #{simple_cnn_forward.4} parent=0 // pred_check
    _
  $region15: #{simple_cnn_forward.4} parent=0 // pred_check_branch
    %16 = sbr.rel (0) target = $region17
  $region16: #{simple_cnn_forward.4} parent=0 // pred_region
    _
  $region17: #{simple_cnn_forward.4} parent=0 // pred_fallthru
    _
  %v18 = vld [vmem:[%s2] sm:$0xff]
  %v19 = vld [vmem:[%s2 + $0x8] sm:$0xff]
  %v20 = vld [vmem:[%s2 + $0x10] sm:$0xff]
  %v21 = vld [vmem:[%s2 + $0x18] sm:$0xff]
  %v22 = vld [vmem:[%s2 + $0x20] sm:$0xff]
  %v23 = vld [vmem:[%s2 + $0x28] sm:$0xff]
  %v24 = vld [vmem:[%s2 + $0x30] sm:$0xff]
  %v25 = vld [vmem:[%s2 + $0x38] sm:$0xff]
  %v26 = vld [vmem:[%s2 + $0x40] sm:$0xff]
  %v27 = vld [vmem:[%s2 + $0x48] sm:$0xff]
  %v28 = vld [vmem:[%s2 + $0x50] sm:$0xff]
  %v29 = vld [vmem:[%s2 + $0x58] sm:$0xff]
  %v30 = vld [vmem:[%s2 + $0x60] sm:$0xff]
  %v31 = vld [vmem:[%s2 + $0x68] sm:$0xff]
  %v32 = vld [vmem:[%s2 + $0x70] sm:$0xff]
  %v33 = vld [vmem:[%s2 + $0x78] sm:$0xff]
  %v34 = vld [vmem:[%s2 + $0x80] sm:$0xff]
  %v35 = vld [vmem:[%s2 + $0x88] sm:$0xff]
  %v36 = vld [vmem:[%s2 + $0x90] sm:$0xff]
  %v37 = vld [vmem:[%s2 + $0x98] sm:$0xff]
  %v38 = vld [vmem:[%s2 + $0xa0] sm:$0xff]
  %v39 = vld [vmem:[%s2 + $0xa8] sm:$0xff]
  %v40 = vld [vmem:[%s2 + $0xb0] sm:$0xff]
  %v41 = vld [vmem:[%s2 + $0xb8] sm:$0xff]
  %v42 = vld [vmem:[%s2 + $0xc0] sm:$0xff]
  %v43 = vld [vmem:[%s2 + $0xc8] sm:$0xff]
  %v44 = vld [vmem:[%s2 + $0xd0] sm:$0xff]
  %v45 = vld [vmem:[%s2 + $0xd8] sm:$0xff]
  %v46 = vld [vmem:[%s2 + $0xe0] sm:$0xff]
  %v47 = vld [vmem:[%s2 + $0xe8] sm:$0xff]
  %v48 = vld [vmem:[%s2 + $0xf0] sm:$0xff]
  %v49 = vld [vmem:[%s2 + $0xf8] sm:$0xff]
  %v50 = vld [vmem:[%s2 + $0x100] sm:$0xff]
  %v51 = vld [vmem:[%s2 + $0x108] sm:$0xff]
  %v52 = vld [vmem:[%s2 + $0x110] sm:$0xff]
  %v53 = vld [vmem:[%s2 + $0x118] sm:$0xff]
  %v54 = vld [vmem:[%s2 + $0x120] sm:$0xff]
  %v55 = vld [vmem:[%s2 + $0x128] sm:$0xff]
  %v56 = vld [vmem:[%s2 + $0x130] sm:$0xff]
  %v57 = vld [vmem:[%s2 + $0x138] sm:$0xff]
  %v58 = vld [vmem:[%s2 + $0x140] sm:$0xff]
  %v59 = vld [vmem:[%s2 + $0x148] sm:$0xff]
  %v60 = vld [vmem:[%s2 + $0x150] sm:$0xff]
  %v61 = vld [vmem:[%s2 + $0x158] sm:$0xff]
  %v62 = vld [vmem:[%s2 + $0x160] sm:$0xff]
  %v63 = vld [vmem:[%s2 + $0x168] sm:$0xff]
  %v64 = vld [vmem:[%s2 + $0x170] sm:$0xff]
  %v65 = vld [vmem:[%s2 + $0x178] sm:$0xff]
  %v66 = vld [vmem:[%s2 + $0x180] sm:$0xff]
  %v67 = vld [vmem:[%s2 + $0x188] sm:$0xff]
  %v68 = vld [vmem:[%s2 + $0x190] sm:$0xff]
  %v69 = vld [vmem:[%s2 + $0x198] sm:$0xff]
  %v70 = vld [vmem:[%s2 + $0x1a0] sm:$0x33]
  %v71 = vld [vmem:[%s0] sm:$0xff]
  %v72 = vld [vmem:[%s0 + $0x8] sm:$0xff]
  %v73 = vld [vmem:[%s0 + $0x10] sm:$0xff]
  %v74 = vld [vmem:[%s0 + $0x18] sm:$0xff]
  %v79 = vunpack.c.l.b16 %v71
  %v80 = vunpack.c.h.b16 %v71
  %v81 = vunpack.c.l.b16 %v72
  %v82 = vunpack.c.h.b16 %v72
  %v83 = vunpack.c.l.b16 %v73
  %v84 = vunpack.c.h.b16 %v73
  %v85 = vunpack.c.l.b16 %v74
  %v86 = vunpack.c.h.b16 %v74
  %v87 = vpack.c.b16 %v83, %v79
  %v88 = vpack.c.b16 %v84, %v80
  %v89 = vpack.c.b16 %v85, %v81
  %v90 = vpack.c.b16 %v86, %v82
  %v147 = vunpack.c.l.b16 %v18
  %v148 = vunpack.c.h.b16 %v18
  %v149 = vunpack.c.l.b16 %v19
  %v150 = vunpack.c.h.b16 %v19
  %v151 = vunpack.c.l.b16 %v20
  %v152 = vunpack.c.h.b16 %v20
  %v153 = vunpack.c.l.b16 %v21
  %v154 = vunpack.c.h.b16 %v21
  %v155 = vunpack.c.l.b16 %v22
  %v156 = vunpack.c.h.b16 %v22
  %v157 = vunpack.c.l.b16 %v23
  %v158 = vunpack.c.h.b16 %v23
  %v159 = vunpack.c.l.b16 %v24
  %v160 = vunpack.c.h.b16 %v24
  %v161 = vunpack.c.l.b16 %v25
  %v162 = vunpack.c.h.b16 %v25
  %v163 = vunpack.c.l.b16 %v26
  %v164 = vunpack.c.h.b16 %v26
  %v165 = vunpack.c.l.b16 %v27
  %v166 = vunpack.c.h.b16 %v27
  %v167 = vunpack.c.l.b16 %v28
  %v168 = vunpack.c.h.b16 %v28
  %v169 = vunpack.c.l.b16 %v29
  %v170 = vunpack.c.h.b16 %v29
  %v171 = vunpack.c.l.b16 %v30
  %v172 = vunpack.c.h.b16 %v30
  %v173 = vunpack.c.l.b16 %v31
  %v174 = vunpack.c.h.b16 %v31
  %v175 = vunpack.c.l.b16 %v32
  %v176 = vunpack.c.h.b16 %v32
  %v177 = vunpack.c.l.b16 %v33
  %v178 = vunpack.c.h.b16 %v33
  %v179 = vunpack.c.l.b16 %v34
  %v180 = vunpack.c.h.b16 %v34
  %v181 = vunpack.c.l.b16 %v35
  %v182 = vunpack.c.h.b16 %v35
  %v183 = vunpack.c.l.b16 %v36
  %v184 = vunpack.c.h.b16 %v36
  %v185 = vunpack.c.l.b16 %v37
  %v186 = vunpack.c.h.b16 %v37
  %v187 = vunpack.c.l.b16 %v38
  %v188 = vunpack.c.h.b16 %v38
  %v189 = vunpack.c.l.b16 %v39
  %v190 = vunpack.c.h.b16 %v39
  %v191 = vunpack.c.l.b16 %v40
  %v192 = vunpack.c.h.b16 %v40
  %v193 = vunpack.c.l.b16 %v41
  %v194 = vunpack.c.h.b16 %v41
  %v195 = vunpack.c.l.b16 %v42
  %v196 = vunpack.c.h.b16 %v42
  %v197 = vunpack.c.l.b16 %v43
  %v198 = vunpack.c.h.b16 %v43
  %v199 = vunpack.c.l.b16 %v44
  %v200 = vunpack.c.h.b16 %v44
  %v201 = vunpack.c.l.b16 %v45
  %v202 = vunpack.c.h.b16 %v45
  %v203 = vunpack.c.l.b16 %v46
  %v204 = vunpack.c.h.b16 %v46
  %v205 = vunpack.c.l.b16 %v47
  %v206 = vunpack.c.h.b16 %v47
  %v207 = vunpack.c.l.b16 %v48
  %v208 = vunpack.c.h.b16 %v48
  %v209 = vunpack.c.l.b16 %v49
  %v210 = vunpack.c.h.b16 %v49
  %v211 = vunpack.c.l.b16 %v50
  %v212 = vunpack.c.h.b16 %v50
  %v213 = vunpack.c.l.b16 %v51
  %v214 = vunpack.c.h.b16 %v51
  %v215 = vunpack.c.l.b16 %v52
  %v216 = vunpack.c.h.b16 %v52
  %v217 = vunpack.c.l.b16 %v53
  %v218 = vunpack.c.h.b16 %v53
  %v219 = vunpack.c.l.b16 %v54
  %v220 = vunpack.c.h.b16 %v54
  %v221 = vunpack.c.l.b16 %v55
  %v222 = vunpack.c.h.b16 %v55
  %v223 = vunpack.c.l.b16 %v56
  %v224 = vunpack.c.h.b16 %v56
  %v225 = vunpack.c.l.b16 %v57
  %v226 = vunpack.c.h.b16 %v57
  %v227 = vunpack.c.l.b16 %v58
  %v228 = vunpack.c.h.b16 %v58
  %v229 = vunpack.c.l.b16 %v59
  %v230 = vunpack.c.h.b16 %v59
  %v231 = vunpack.c.l.b16 %v60
  %v232 = vunpack.c.h.b16 %v60
  %v233 = vunpack.c.l.b16 %v61
  %v234 = vunpack.c.h.b16 %v61
  %v235 = vunpack.c.l.b16 %v62
  %v236 = vunpack.c.h.b16 %v62
  %v237 = vunpack.c.l.b16 %v63
  %v238 = vunpack.c.h.b16 %v63
  %v239 = vunpack.c.l.b16 %v64
  %v240 = vunpack.c.h.b16 %v64
  %v241 = vunpack.c.l.b16 %v65
  %v242 = vunpack.c.h.b16 %v65
  %v243 = vunpack.c.l.b16 %v66
  %v244 = vunpack.c.h.b16 %v66
  %v245 = vunpack.c.l.b16 %v67
  %v246 = vunpack.c.h.b16 %v67
  %v247 = vunpack.c.l.b16 %v68
  %v248 = vunpack.c.h.b16 %v68
  %v249 = vunpack.c.l.b16 %v69
  %v250 = vunpack.c.h.b16 %v69
  %v251 = vunpack.c.l.b16 %v70
  %v252 = vunpack.c.h.b16 %v70
  %v253 = vpack.c.b16 %v149, %v147
  %v254 = vpack.c.b16 %v150, %v148
  %v255 = vpack.c.b16 %v153, %v151
  %v256 = vpack.c.b16 %v154, %v152
  %v257 = vpack.c.b16 %v157, %v155
  %v258 = vpack.c.b16 %v158, %v156
  %v259 = vpack.c.b16 %v161, %v159
  %v260 = vpack.c.b16 %v162, %v160
  %v261 = vpack.c.b16 %v165, %v163
  %v262 = vpack.c.b16 %v166, %v164
  %v263 = vpack.c.b16 %v169, %v167
  %v264 = vpack.c.b16 %v170, %v168
  %v265 = vpack.c.b16 %v173, %v171
  %v266 = vpack.c.b16 %v174, %v172
  %v267 = vpack.c.b16 %v177, %v175
  %v268 = vpack.c.b16 %v178, %v176
  %v269 = vpack.c.b16 %v181, %v179
  %v270 = vpack.c.b16 %v182, %v180
  %v271 = vpack.c.b16 %v185, %v183
  %v272 = vpack.c.b16 %v186, %v184
  %v273 = vpack.c.b16 %v189, %v187
  %v274 = vpack.c.b16 %v190, %v188
  %v275 = vpack.c.b16 %v193, %v191
  %v276 = vpack.c.b16 %v194, %v192
  %v277 = vpack.c.b16 %v197, %v195
  %v278 = vpack.c.b16 %v198, %v196
  %v279 = vpack.c.b16 %v201, %v199
  %v280 = vpack.c.b16 %v202, %v200
  %v281 = vpack.c.b16 %v205, %v203
  %v282 = vpack.c.b16 %v206, %v204
  %v283 = vpack.c.b16 %v209, %v207
  %v284 = vpack.c.b16 %v210, %v208
  %v285 = vpack.c.b16 %v213, %v211
  %v286 = vpack.c.b16 %v214, %v212
  %v287 = vpack.c.b16 %v217, %v215
  %v288 = vpack.c.b16 %v218, %v216
  %v289 = vpack.c.b16 %v221, %v219
  %v290 = vpack.c.b16 %v222, %v220
  %v291 = vpack.c.b16 %v225, %v223
  %v292 = vpack.c.b16 %v226, %v224
  %v293 = vpack.c.b16 %v229, %v227
  %v294 = vpack.c.b16 %v230, %v228
  %v295 = vpack.c.b16 %v233, %v231
  %v296 = vpack.c.b16 %v234, %v232
  %v297 = vpack.c.b16 %v237, %v235
  %v298 = vpack.c.b16 %v238, %v236
  %v299 = vpack.c.b16 %v241, %v239
  %v300 = vpack.c.b16 %v242, %v240
  %v301 = vpack.c.b16 %v245, %v243
  %v302 = vpack.c.b16 %v246, %v244
  %v303 = vpack.c.b16 %v249, %v247
  %v304 = vpack.c.b16 %v250, %v248
  %v305 = vpack.c.b16 %v251, %v251
  %v306 = vpack.c.b16 %v252, %v252
  %vm359 = vcmask 293888
  %v361 = vsel %vm359, %v90, 0
  %vm363 = vcmask 1041408
  %v365 = vsel %vm363, %v305, 0
  %v368 = vsel %vm363, %v306, 0
  %370 = vmatpush.bf16.msra.mxu0 %v267
  %371 = vmatpush.bf16.msra.mxu0 %v265
  %372 = vmatpush.bf16.msra.mxu0 %v263
  %373 = vmatpush.bf16.msra.mxu0 %v261
  %374 = vmatpush.bf16.msra.mxu0 %v259
  %375 = vmatpush.bf16.msra.mxu0 %v257
  %376 = vmatpush.bf16.msra.mxu0 %v255
  %377 = vmatpush.bf16.msra.mxu0 %v253
  %378 = vmatmul.bf16.gmra.mxu0 %v87
  %v379 = vpop.f32.mrf.mxu0
  %v380 = vadd.f32 0.0, %v379
  %v381 = vpop.f32.mrf.mxu0
  %v382 = vadd.f32 0.0, %v381
  %383 = vdwg.mxu0
  %384 = vmatpush.bf16.msra.mxu0 %v283
  %385 = vmatpush.bf16.msra.mxu0 %v281
  %386 = vmatpush.bf16.msra.mxu0 %v279
  %387 = vmatpush.bf16.msra.mxu0 %v277
  %388 = vmatpush.bf16.msra.mxu0 %v275
  %389 = vmatpush.bf16.msra.mxu0 %v273
  %390 = vmatpush.bf16.msra.mxu0 %v271
  %391 = vmatpush.bf16.msra.mxu0 %v269
  %392 = vmatmul.bf16.gmra.mxu0 %v88
  %v393 = vpop.f32.mrf.mxu0
  %v394 = vadd.f32 %v380, %v393
  %v395 = vpop.f32.mrf.mxu0
  %v396 = vadd.f32 %v382, %v395
  %397 = vdwg.mxu0
  %398 = vmatpush.bf16.msra.mxu0 %v299
  %399 = vmatpush.bf16.msra.mxu0 %v297
  %400 = vmatpush.bf16.msra.mxu0 %v295
  %401 = vmatpush.bf16.msra.mxu0 %v293
  %402 = vmatpush.bf16.msra.mxu0 %v291
  %403 = vmatpush.bf16.msra.mxu0 %v289
  %404 = vmatpush.bf16.msra.mxu0 %v287
  %405 = vmatpush.bf16.msra.mxu0 %v285
  %406 = vmatmul.bf16.gmra.mxu0 %v89
  %v407 = vpop.f32.mrf.mxu0
  %v408 = vadd.f32 %v394, %v407
  %v409 = vpop.f32.mrf.mxu0
  %v410 = vadd.f32 %v396, %v409
  %411 = vdwg.mxu0
  %412 = vmatpush.bf16.msra.mxu0 0
  %413 = vmatpush.bf16.msra.mxu0 0
  %414 = vmatpush.bf16.msra.mxu0 0
  %415 = vmatpush.bf16.msra.mxu0 0
  %416 = vmatpush.bf16.msra.mxu0 0
  %417 = vmatpush.bf16.msra.mxu0 %v365
  %418 = vmatpush.bf16.msra.mxu0 %v303
  %419 = vmatpush.bf16.msra.mxu0 %v301
  %420 = vmatmul.bf16.gmra.mxu0 %v361
  %v421 = vpop.f32.mrf.mxu0
  %v422 = vadd.f32 %v408, %v421
  %v423 = vpop.f32.mrf.mxu0
  %v424 = vadd.f32 %v410, %v423
  %425 = vdwg.mxu0
  %426 = vmatpush.bf16.msra.mxu0 %v268
  %427 = vmatpush.bf16.msra.mxu0 %v266
  %428 = vmatpush.bf16.msra.mxu0 %v264
  %429 = vmatpush.bf16.msra.mxu0 %v262
  %430 = vmatpush.bf16.msra.mxu0 %v260
  %431 = vmatpush.bf16.msra.mxu0 %v258
  %432 = vmatpush.bf16.msra.mxu0 %v256
  %433 = vmatpush.bf16.msra.mxu0 %v254
  %434 = vmatmul.bf16.gmra.mxu0 %v87
  %v435 = vpop.f32.mrf.mxu0
  %v436 = vadd.f32 0.0, %v435
  %v437 = vpop.f32.mrf.mxu0
  %v438 = vadd.f32 0.0, %v437
  %439 = vdwg.mxu0
  %440 = vmatpush.bf16.msra.mxu0 %v284
  %441 = vmatpush.bf16.msra.mxu0 %v282
  %442 = vmatpush.bf16.msra.mxu0 %v280
  %443 = vmatpush.bf16.msra.mxu0 %v278
  %444 = vmatpush.bf16.msra.mxu0 %v276
  %445 = vmatpush.bf16.msra.mxu0 %v274
  %446 = vmatpush.bf16.msra.mxu0 %v272
  %447 = vmatpush.bf16.msra.mxu0 %v270
  %448 = vmatmul.bf16.gmra.mxu0 %v88
  %v449 = vpop.f32.mrf.mxu0
  %v450 = vadd.f32 %v436, %v449
  %v451 = vpop.f32.mrf.mxu0
  %v452 = vadd.f32 %v438, %v451
  %453 = vdwg.mxu0
  %454 = vmatpush.bf16.msra.mxu0 %v300
  %455 = vmatpush.bf16.msra.mxu0 %v298
  %456 = vmatpush.bf16.msra.mxu0 %v296
  %457 = vmatpush.bf16.msra.mxu0 %v294
  %458 = vmatpush.bf16.msra.mxu0 %v292
  %459 = vmatpush.bf16.msra.mxu0 %v290
  %460 = vmatpush.bf16.msra.mxu0 %v288
  %461 = vmatpush.bf16.msra.mxu0 %v286
  %462 = vmatmul.bf16.gmra.mxu0 %v89
  %v463 = vpop.f32.mrf.mxu0
  %v464 = vadd.f32 %v450, %v463
  %v465 = vpop.f32.mrf.mxu0
  %v466 = vadd.f32 %v452, %v465
  %467 = vdwg.mxu0
  %468 = vmatpush.bf16.msra.mxu0 0
  %469 = vmatpush.bf16.msra.mxu0 0
  %470 = vmatpush.bf16.msra.mxu0 0
  %471 = vmatpush.bf16.msra.mxu0 0
  %472 = vmatpush.bf16.msra.mxu0 0
  %473 = vmatpush.bf16.msra.mxu0 %v368
  %474 = vmatpush.bf16.msra.mxu0 %v304
  %475 = vmatpush.bf16.msra.mxu0 %v302
  %476 = vmatmul.bf16.gmra.mxu0 %v361
  %v477 = vpop.f32.mrf.mxu0
  %v478 = vadd.f32 %v464, %v477
  %v479 = vpop.f32.mrf.mxu0
  %v480 = vadd.f32 %v466, %v479
  %481 = vdwg.mxu0
  %v482 = vld [vmem:[%s1] sm:$0xff]
  %v483 = vld [vmem:[%s1 + $0x8] sm:$0xff]
  %v484 = vld [vmem:[%s1 + $0x10] sm:$0xff]
  %v485 = vld [vmem:[%s1 + $0x18] sm:$0xff]
  %v490 = vunpack.c.l.b16 %v482
  %v491 = vunpack.c.h.b16 %v482
  %v492 = vunpack.c.l.b16 %v483
  %v493 = vunpack.c.h.b16 %v483
  %v494 = vunpack.c.l.b16 %v484
  %v495 = vunpack.c.h.b16 %v484
  %v496 = vunpack.c.l.b16 %v485
  %v497 = vunpack.c.h.b16 %v485
  %v498 = vpack.c.b16 %v494, %v490
  %v499 = vpack.c.b16 %v495, %v491
  %v500 = vpack.c.b16 %v496, %v492
  %v501 = vpack.c.b16 %v497, %v493
  %v506 = vsel %vm359, %v501, 0
  %508 = vmatpush.bf16.msra.mxu0 %v267
  %509 = vmatpush.bf16.msra.mxu0 %v265
  %510 = vmatpush.bf16.msra.mxu0 %v263
  %511 = vmatpush.bf16.msra.mxu0 %v261
  %512 = vmatpush.bf16.msra.mxu0 %v259
  %513 = vmatpush.bf16.msra.mxu0 %v257
  %514 = vmatpush.bf16.msra.mxu0 %v255
  %515 = vmatpush.bf16.msra.mxu0 %v253
  %516 = vmatmul.bf16.gmra.mxu0 %v498
  %v517 = vpop.f32.mrf.mxu0
  %v518 = vadd.f32 0.0, %v517
  %v519 = vpop.f32.mrf.mxu0
  %v520 = vadd.f32 0.0, %v519
  %521 = vdwg.mxu0
  %522 = vmatpush.bf16.msra.mxu0 %v283
  %523 = vmatpush.bf16.msra.mxu0 %v281
  %524 = vmatpush.bf16.msra.mxu0 %v279
  %525 = vmatpush.bf16.msra.mxu0 %v277
  %526 = vmatpush.bf16.msra.mxu0 %v275
  %527 = vmatpush.bf16.msra.mxu0 %v273
  %528 = vmatpush.bf16.msra.mxu0 %v271
  %529 = vmatpush.bf16.msra.mxu0 %v269
  %530 = vmatmul.bf16.gmra.mxu0 %v499
  %v531 = vpop.f32.mrf.mxu0
  %v532 = vadd.f32 %v518, %v531
  %v533 = vpop.f32.mrf.mxu0
  %v534 = vadd.f32 %v520, %v533
  %535 = vdwg.mxu0
  %536 = vmatpush.bf16.msra.mxu0 %v299
  %537 = vmatpush.bf16.msra.mxu0 %v297
  %538 = vmatpush.bf16.msra.mxu0 %v295
  %539 = vmatpush.bf16.msra.mxu0 %v293
  %540 = vmatpush.bf16.msra.mxu0 %v291
  %541 = vmatpush.bf16.msra.mxu0 %v289
  %542 = vmatpush.bf16.msra.mxu0 %v287
  %543 = vmatpush.bf16.msra.mxu0 %v285
  %544 = vmatmul.bf16.gmra.mxu0 %v500
  %v545 = vpop.f32.mrf.mxu0
  %v546 = vadd.f32 %v532, %v545
  %v547 = vpop.f32.mrf.mxu0
  %v548 = vadd.f32 %v534, %v547
  %549 = vdwg.mxu0
  %550 = vmatpush.bf16.msra.mxu0 0
  %551 = vmatpush.bf16.msra.mxu0 0
  %552 = vmatpush.bf16.msra.mxu0 0
  %553 = vmatpush.bf16.msra.mxu0 0
  %554 = vmatpush.bf16.msra.mxu0 0
  %555 = vmatpush.bf16.msra.mxu0 %v365
  %556 = vmatpush.bf16.msra.mxu0 %v303
  %557 = vmatpush.bf16.msra.mxu0 %v301
  %558 = vmatmul.bf16.gmra.mxu0 %v506
  %v559 = vpop.f32.mrf.mxu0
  %v560 = vadd.f32 %v546, %v559
  %v561 = vpop.f32.mrf.mxu0
  %v562 = vadd.f32 %v548, %v561
  %563 = vdwg.mxu0
  %564 = vmatpush.bf16.msra.mxu0 %v268
  %565 = vmatpush.bf16.msra.mxu0 %v266
  %566 = vmatpush.bf16.msra.mxu0 %v264
  %567 = vmatpush.bf16.msra.mxu0 %v262
  %568 = vmatpush.bf16.msra.mxu0 %v260
  %569 = vmatpush.bf16.msra.mxu0 %v258
  %570 = vmatpush.bf16.msra.mxu0 %v256
  %571 = vmatpush.bf16.msra.mxu0 %v254
  %572 = vmatmul.bf16.gmra.mxu0 %v498
  %v573 = vpop.f32.mrf.mxu0
  %v574 = vadd.f32 0.0, %v573
  %v575 = vpop.f32.mrf.mxu0
  %v576 = vadd.f32 0.0, %v575
  %577 = vdwg.mxu0
  %578 = vmatpush.bf16.msra.mxu0 %v284
  %579 = vmatpush.bf16.msra.mxu0 %v282
  %580 = vmatpush.bf16.msra.mxu0 %v280
  %581 = vmatpush.bf16.msra.mxu0 %v278
  %582 = vmatpush.bf16.msra.mxu0 %v276
  %583 = vmatpush.bf16.msra.mxu0 %v274
  %584 = vmatpush.bf16.msra.mxu0 %v272
  %585 = vmatpush.bf16.msra.mxu0 %v270
  %586 = vmatmul.bf16.gmra.mxu0 %v499
  %v587 = vpop.f32.mrf.mxu0
  %v588 = vadd.f32 %v574, %v587
  %v589 = vpop.f32.mrf.mxu0
  %v590 = vadd.f32 %v576, %v589
  %591 = vdwg.mxu0
  %592 = vmatpush.bf16.msra.mxu0 %v300
  %593 = vmatpush.bf16.msra.mxu0 %v298
  %594 = vmatpush.bf16.msra.mxu0 %v296
  %595 = vmatpush.bf16.msra.mxu0 %v294
  %596 = vmatpush.bf16.msra.mxu0 %v292
  %597 = vmatpush.bf16.msra.mxu0 %v290
  %598 = vmatpush.bf16.msra.mxu0 %v288
  %599 = vmatpush.bf16.msra.mxu0 %v286
  %600 = vmatmul.bf16.gmra.mxu0 %v500
  %v601 = vpop.f32.mrf.mxu0
  %v602 = vadd.f32 %v588, %v601
  %v603 = vpop.f32.mrf.mxu0
  %v604 = vadd.f32 %v590, %v603
  %605 = vdwg.mxu0
  %606 = vmatpush.bf16.msra.mxu0 0
  %607 = vmatpush.bf16.msra.mxu0 0
  %608 = vmatpush.bf16.msra.mxu0 0
  %609 = vmatpush.bf16.msra.mxu0 0
  %610 = vmatpush.bf16.msra.mxu0 0
  %611 = vmatpush.bf16.msra.mxu0 %v368
  %612 = vmatpush.bf16.msra.mxu0 %v304
  %613 = vmatpush.bf16.msra.mxu0 %v302
  %614 = vmatmul.bf16.gmra.mxu0 %v506
  %v615 = vpop.f32.mrf.mxu0
  %v616 = vadd.f32 %v602, %v615
  %v617 = vpop.f32.mrf.mxu0
  %v618 = vadd.f32 %v604, %v617
  %619 = vdwg.mxu0
  %v620 = vmax.f32 %v422, %v478
  %v621 = vmax.f32 %v424, %v480
  %v622 = vmax.f32 %v560, %v616
  %v623 = vmax.f32 %v562, %v618
  %v624 = vmax.f32 %v620, %v622
  %v625 = vmax.f32 %v621, %v623
  %v626 = vld [vmem:[%s3] sm:$0x1]
  %v628 = vperm.slane %v626, 0
  %v630 = vadd.f32 %v624, %v628
  %v631 = vadd.f32 %v625, %v628
  %v632 = vmax.f32 %v630, 0.0
  %v633 = vmax.f32 %v631, 0.0
  %v634 = vpack.c.bf16 %v632, %v632
  %v635 = vpack.c.bf16 %v633, %v633
  %636 = vst [vmem:[%s4] sm:$0xf] %v634
  %637 = vst [vmem:[%s4 + $0x4] sm:$0xf] %v635
  // Predicated region
  $region18: #{simple_cnn_forward.4} parent=0 // pred_check
    _
  $region19: #{simple_cnn_forward.4} parent=0 // pred_check_branch
    %639 = sbr.rel (0) target = $region21
  $region20: #{simple_cnn_forward.4} parent=0 // pred_region
    _
  $region21: #{simple_cnn_forward.4} parent=0 // pred_fallthru
    _
  // Predicated region
  $region22: #{simple_cnn_forward.4} parent=0 // pred_check
    _
  $region23: #{simple_cnn_forward.4} parent=0 // pred_check_branch
    %641 = sbr.rel (0) target = $region25
  $region24: #{simple_cnn_forward.4} parent=0 // pred_region
    _
  $region25: #{simple_cnn_forward.4} parent=0 // pred_fallthru
    _

// kernel: simple_cnn_forward.5
$region0: #{simple_cnn_forward.5}
  #allocation0 [shape = 'u32[]', space=smem, size = 0x4, offset = 0x4, fixed_abs, tag = 'smem constant byte address 0x4 - core index']
  #allocation1 [shape = 'u32[72,128]{1,0:T(1,128)}', space=vmem, size = 0x9000, scoped, tag = 'internal scratch']
  %s0 = inlined_call_operand.vmem [shape: bf16[16,400], index: 0, kind: input, shape index: {}]
  %s1 = inlined_call_operand.vmem [shape: bf16[400,128], index: 1, kind: input, shape index: {}]
  %s2 = inlined_call_operand.vmem [shape: f32[1,128], index: 2, kind: input, shape index: {}]
  %s3 = inlined_call_operand.vmem [shape: bf16[128,128], index: 3, kind: input, shape index: {}]
  %s4 = inlined_call_operand.vmem [shape: f32[1,128], index: 4, kind: input, shape index: {}]
  %s5 = inlined_call_operand.vmem [shape: bf16[128,128], index: 5, kind: input, shape index: {}]
  %s6 = inlined_call_operand.vmem [shape: f32[1,128], index: 6, kind: input, shape index: {}]
  %s7 = inlined_call_operand.vmem [shape: f32[16,128], index: 7, kind: output, shape index: {0}]
  %s8 = inlined_call_operand.vmem [shape: f32[16,128], index: 8, kind: output, shape index: {1}]
  %9 = xla_tuple %s7, %s8
  %s10 = sld [smem:[#allocation0]]
  $region46: #{simple_cnn_forward.5} parent=0
    _
  %s12 = ssub.s32 1, %s10
  %s13 = scalar_select 0, %s12, %s10
  // Predicated region
  $region2: #{simple_cnn_forward.5} parent=0 // pred_check
    _
  $region3: #{simple_cnn_forward.5} parent=0 // pred_check_branch
    %15 = sbr.rel (0) target = $region5
  $region4: #{simple_cnn_forward.5} parent=0 // pred_region
    _
  $region5: #{simple_cnn_forward.5} parent=0 // pred_fallthru
    _
  // Predicated region
  $region6: #{simple_cnn_forward.5} parent=0 // pred_check
    _
  $region7: #{simple_cnn_forward.5} parent=0 // pred_check_branch
    %17 = sbr.rel (0) target = $region9
  $region8: #{simple_cnn_forward.5} parent=0 // pred_region
    _
  $region9: #{simple_cnn_forward.5} parent=0 // pred_fallthru
    _
  // Predicated region
  $region10: #{simple_cnn_forward.5} parent=0 // pred_check
    _
  $region11: #{simple_cnn_forward.5} parent=0 // pred_check_branch
    %19 = sbr.rel (0) target = $region13
  $region12: #{simple_cnn_forward.5} parent=0 // pred_region
    _
  $region13: #{simple_cnn_forward.5} parent=0 // pred_fallthru
    _
  // Predicated region
  $region14: #{simple_cnn_forward.5} parent=0 // pred_check
    _
  $region15: #{simple_cnn_forward.5} parent=0 // pred_check_branch
    %21 = sbr.rel (0) target = $region17
  $region16: #{simple_cnn_forward.5} parent=0 // pred_region
    _
  $region17: #{simple_cnn_forward.5} parent=0 // pred_fallthru
    _
  // Predicated region
  $region18: #{simple_cnn_forward.5} parent=0 // pred_check
    _
  $region19: #{simple_cnn_forward.5} parent=0 // pred_check_branch
    %23 = sbr.rel (0) target = $region21
  $region20: #{simple_cnn_forward.5} parent=0 // pred_region
    _
  $region21: #{simple_cnn_forward.5} parent=0 // pred_fallthru
    _
  // Predicated region
  $region22: #{simple_cnn_forward.5} parent=0 // pred_check
    _
  $region23: #{simple_cnn_forward.5} parent=0 // pred_check_branch
    %25 = sbr.rel (0) target = $region25
  $region24: #{simple_cnn_forward.5} parent=0 // pred_region
    _
  $region25: #{simple_cnn_forward.5} parent=0 // pred_fallthru
    _
  // Predicated region
  $region26: #{simple_cnn_forward.5} parent=0 // pred_check
    _
  $region27: #{simple_cnn_forward.5} parent=0 // pred_check_branch
    %27 = sbr.rel (0) target = $region29
  $region28: #{simple_cnn_forward.5} parent=0 // pred_region
    _
  $region29: #{simple_cnn_forward.5} parent=0 // pred_fallthru
    _
  %v29 = vld [vmem:[%s0] sm:$0xff]
  %v30 = vld [vmem:[%s0 + $0x8] sm:$0xff]
  %v31 = vld [vmem:[%s0 + $0x10] sm:$0xff]
  %v32 = vld [vmem:[%s0 + $0x18] sm:$0xff]
  %v33 = vld [vmem:[%s1] sm:$0xf]
  %v34 = vld [vmem:[%s1 + $0x4] sm:$0xf]
  %v35 = vld [vmem:[%s1 + $0x8] sm:$0xf]
  %v36 = vld [vmem:[%s1 + $0xc] sm:$0xf]
  %v37 = vld [vmem:[%s1 + $0x10] sm:$0xf]
  %v38 = vld [vmem:[%s1 + $0x14] sm:$0xf]
  %v39 = vld [vmem:[%s1 + $0x18] sm:$0xf]
  %v40 = vld [vmem:[%s1 + $0x1c] sm:$0xf]
  %v41 = vld [vmem:[%s1 + $0x20] sm:$0xf]
  %v42 = vld [vmem:[%s1 + $0x24] sm:$0xf]
  %v43 = vld [vmem:[%s1 + $0x28] sm:$0xf]
  %v44 = vld [vmem:[%s1 + $0x2c] sm:$0xf]
  %v45 = vld [vmem:[%s1 + $0x30] sm:$0xf]
  %v46 = vld [vmem:[%s1 + $0x34] sm:$0xf]
  %v47 = vld [vmem:[%s1 + $0x38] sm:$0xf]
  %v48 = vld [vmem:[%s1 + $0x3c] sm:$0xf]
  %v49 = vld [vmem:[%s1 + $0x40] sm:$0xf]
  %v50 = vld [vmem:[%s1 + $0x44] sm:$0xf]
  %v51 = vld [vmem:[%s1 + $0x48] sm:$0xf]
  %v52 = vld [vmem:[%s1 + $0x4c] sm:$0xf]
  %v53 = vld [vmem:[%s1 + $0x50] sm:$0xf]
  %v54 = vld [vmem:[%s1 + $0x54] sm:$0xf]
  %v55 = vld [vmem:[%s1 + $0x58] sm:$0xf]
  %v56 = vld [vmem:[%s1 + $0x5c] sm:$0xf]
  %v57 = vld [vmem:[%s1 + $0x60] sm:$0xf]
  %v58 = vld [vmem:[%s1 + $0x64] sm:$0xf]
  %v59 = vld [vmem:[%s1 + $0x68] sm:$0xf]
  %v60 = vld [vmem:[%s1 + $0x6c] sm:$0xf]
  %v61 = vld [vmem:[%s1 + $0x70] sm:$0xf]
  %v62 = vld [vmem:[%s1 + $0x74] sm:$0xf]
  %v63 = vld [vmem:[%s1 + $0x78] sm:$0xf]
  %v64 = vld [vmem:[%s1 + $0x7c] sm:$0xf]
  %v65 = vld [vmem:[%s1 + $0x80] sm:$0xf]
  %v66 = vld [vmem:[%s1 + $0x84] sm:$0xf]
  %v67 = vld [vmem:[%s1 + $0x88] sm:$0xf]
  %v68 = vld [vmem:[%s1 + $0x8c] sm:$0xf]
  %v69 = vld [vmem:[%s1 + $0x90] sm:$0xf]
  %v70 = vld [vmem:[%s1 + $0x94] sm:$0xf]
  %v71 = vld [vmem:[%s1 + $0x98] sm:$0xf]
  %v72 = vld [vmem:[%s1 + $0x9c] sm:$0xf]
  %v73 = vld [vmem:[%s1 + $0xa0] sm:$0xf]
  %v74 = vld [vmem:[%s1 + $0xa4] sm:$0xf]
  %v75 = vld [vmem:[%s1 + $0xa8] sm:$0xf]
  %v76 = vld [vmem:[%s1 + $0xac] sm:$0xf]
  %v77 = vld [vmem:[%s1 + $0xb0] sm:$0xf]
  %v78 = vld [vmem:[%s1 + $0xb4] sm:$0xf]
  %v79 = vld [vmem:[%s1 + $0xb8] sm:$0xf]
  %v80 = vld [vmem:[%s1 + $0xbc] sm:$0xf]
  %v81 = vld [vmem:[%s1 + $0xc0] sm:$0xf]
  %v82 = vld [vmem:[%s1 + $0xc4] sm:$0xf]
  %v83 = vld [vmem:[%s2] sm:$0x1]
  %v85 = vperm.slane %v83, 0
  %v91 = vunpack.c.l.b16 %v29
  %v92 = vunpack.c.h.b16 %v29
  %v93 = vunpack.c.l.b16 %v30
  %v94 = vunpack.c.h.b16 %v30
  %v95 = vunpack.c.l.b16 %v31
  %v96 = vunpack.c.h.b16 %v31
  %v97 = vunpack.c.l.b16 %v32
  %v98 = vunpack.c.h.b16 %v32
  %v99 = vpack.c.b16 %v95, %v91
  %v100 = vpack.c.b16 %v96, %v92
  %v101 = vpack.c.b16 %v97, %v93
  %v102 = vpack.c.b16 %v98, %v94
  %v156 = vunpack.c.l.b16 %v33
  %v157 = vunpack.c.l.b16 %v34
  %v158 = vunpack.c.l.b16 %v35
  %v159 = vunpack.c.l.b16 %v36
  %v160 = vunpack.c.l.b16 %v37
  %v161 = vunpack.c.l.b16 %v38
  %v162 = vunpack.c.l.b16 %v39
  %v163 = vunpack.c.l.b16 %v40
  %v164 = vunpack.c.l.b16 %v41
  %v165 = vunpack.c.l.b16 %v42
  %v166 = vunpack.c.l.b16 %v43
  %v167 = vunpack.c.l.b16 %v44
  %v168 = vunpack.c.l.b16 %v45
  %v169 = vunpack.c.l.b16 %v46
  %v170 = vunpack.c.l.b16 %v47
  %v171 = vunpack.c.l.b16 %v48
  %v172 = vunpack.c.l.b16 %v49
  %v173 = vunpack.c.l.b16 %v50
  %v174 = vunpack.c.l.b16 %v51
  %v175 = vunpack.c.l.b16 %v52
  %v176 = vunpack.c.l.b16 %v53
  %v177 = vunpack.c.l.b16 %v54
  %v178 = vunpack.c.l.b16 %v55
  %v179 = vunpack.c.l.b16 %v56
  %v180 = vunpack.c.l.b16 %v57
  %v181 = vunpack.c.l.b16 %v58
  %v182 = vunpack.c.l.b16 %v59
  %v183 = vunpack.c.l.b16 %v60
  %v184 = vunpack.c.l.b16 %v61
  %v185 = vunpack.c.l.b16 %v62
  %v186 = vunpack.c.l.b16 %v63
  %v187 = vunpack.c.l.b16 %v64
  %v188 = vunpack.c.l.b16 %v65
  %v189 = vunpack.c.l.b16 %v66
  %v190 = vunpack.c.l.b16 %v67
  %v191 = vunpack.c.l.b16 %v68
  %v192 = vunpack.c.l.b16 %v69
  %v193 = vunpack.c.l.b16 %v70
  %v194 = vunpack.c.l.b16 %v71
  %v195 = vunpack.c.l.b16 %v72
  %v196 = vunpack.c.l.b16 %v73
  %v197 = vunpack.c.l.b16 %v74
  %v198 = vunpack.c.l.b16 %v75
  %v199 = vunpack.c.l.b16 %v76
  %v200 = vunpack.c.l.b16 %v77
  %v201 = vunpack.c.l.b16 %v78
  %v202 = vunpack.c.l.b16 %v79
  %v203 = vunpack.c.l.b16 %v80
  %v204 = vunpack.c.l.b16 %v81
  %v205 = vunpack.c.l.b16 %v82
  %v206 = vpack.c.b16 %v157, %v156
  %v207 = vpack.c.b16 %v159, %v158
  %v208 = vpack.c.b16 %v161, %v160
  %v209 = vpack.c.b16 %v163, %v162
  %v210 = vpack.c.b16 %v165, %v164
  %v211 = vpack.c.b16 %v167, %v166
  %v212 = vpack.c.b16 %v169, %v168
  %v213 = vpack.c.b16 %v171, %v170
  %v214 = vpack.c.b16 %v173, %v172
  %v215 = vpack.c.b16 %v175, %v174
  %v216 = vpack.c.b16 %v177, %v176
  %v217 = vpack.c.b16 %v179, %v178
  %v218 = vpack.c.b16 %v181, %v180
  %v219 = vpack.c.b16 %v183, %v182
  %v220 = vpack.c.b16 %v185, %v184
  %v221 = vpack.c.b16 %v187, %v186
  %v222 = vpack.c.b16 %v189, %v188
  %v223 = vpack.c.b16 %v191, %v190
  %v224 = vpack.c.b16 %v193, %v192
  %v225 = vpack.c.b16 %v195, %v194
  %v226 = vpack.c.b16 %v197, %v196
  %v227 = vpack.c.b16 %v199, %v198
  %v228 = vpack.c.b16 %v201, %v200
  %v229 = vpack.c.b16 %v203, %v202
  %v230 = vpack.c.b16 %v205, %v204
  %vm256 = vcmask 130048
  %v258 = vsel %vm256, %v102, 0
  %260 = vmatpush.bf16.msra.mxu0 %v213
  %261 = vmatpush.bf16.msra.mxu0 %v212
  %262 = vmatpush.bf16.msra.mxu0 %v211
  %263 = vmatpush.bf16.msra.mxu0 %v210
  %264 = vmatpush.bf16.msra.mxu0 %v209
  %265 = vmatpush.bf16.msra.mxu0 %v208
  %266 = vmatpush.bf16.msra.mxu0 %v207
  %267 = vmatpush.bf16.msra.mxu0 %v206
  %268 = vmatmul.bf16.gmra.mxu0 %v99
  %v269 = vpop.f32.mrf.mxu0
  %v270 = vadd.f32 %v85, %v269
  %v271 = vpop.f32.mrf.mxu0
  %v272 = vadd.f32 %v85, %v271
  %273 = vdwg.mxu0
  %274 = vmatpush.bf16.msra.mxu0 %v221
  %275 = vmatpush.bf16.msra.mxu0 %v220
  %276 = vmatpush.bf16.msra.mxu0 %v219
  %277 = vmatpush.bf16.msra.mxu0 %v218
  %278 = vmatpush.bf16.msra.mxu0 %v217
  %279 = vmatpush.bf16.msra.mxu0 %v216
  %280 = vmatpush.bf16.msra.mxu0 %v215
  %281 = vmatpush.bf16.msra.mxu0 %v214
  %282 = vmatmul.bf16.gmra.mxu0 %v100
  %v283 = vpop.f32.mrf.mxu0
  %v284 = vadd.f32 %v270, %v283
  %v285 = vpop.f32.mrf.mxu0
  %v286 = vadd.f32 %v272, %v285
  %287 = vdwg.mxu0
  %288 = vmatpush.bf16.msra.mxu0 %v229
  %289 = vmatpush.bf16.msra.mxu0 %v228
  %290 = vmatpush.bf16.msra.mxu0 %v227
  %291 = vmatpush.bf16.msra.mxu0 %v226
  %292 = vmatpush.bf16.msra.mxu0 %v225
  %293 = vmatpush.bf16.msra.mxu0 %v224
  %294 = vmatpush.bf16.msra.mxu0 %v223
  %295 = vmatpush.bf16.msra.mxu0 %v222
  %296 = vmatmul.bf16.gmra.mxu0 %v101
  %v297 = vpop.f32.mrf.mxu0
  %v298 = vadd.f32 %v284, %v297
  %v299 = vpop.f32.mrf.mxu0
  %v300 = vadd.f32 %v286, %v299
  %301 = vdwg.mxu0
  %302 = vmatpush.bf16.msra.mxu0 0
  %303 = vmatpush.bf16.msra.mxu0 0
  %304 = vmatpush.bf16.msra.mxu0 0
  %305 = vmatpush.bf16.msra.mxu0 0
  %306 = vmatpush.bf16.msra.mxu0 0
  %307 = vmatpush.bf16.msra.mxu0 0
  %308 = vmatpush.bf16.msra.mxu0 0
  %309 = vmatpush.bf16.msra.mxu0 %v230
  %310 = vmatmul.bf16.gmra.mxu0 %v258
  %v311 = vpop.f32.mrf.mxu0
  %v312 = vadd.f32 %v298, %v311
  %v313 = vpop.f32.mrf.mxu0
  %v314 = vadd.f32 %v300, %v313
  %315 = vdwg.mxu0
  %v316 = vmax.f32 %v312, 0.0
  %v317 = vmax.f32 %v314, 0.0
  %v318 = vpack.c.bf16 %v317, %v316
  %v319 = vld [vmem:[%s3] sm:$0xf]
  %v320 = vld [vmem:[%s3 + $0x4] sm:$0xf]
  %v321 = vld [vmem:[%s3 + $0x8] sm:$0xf]
  %v322 = vld [vmem:[%s3 + $0xc] sm:$0xf]
  %v323 = vld [vmem:[%s3 + $0x10] sm:$0xf]
  %v324 = vld [vmem:[%s3 + $0x14] sm:$0xf]
  %v325 = vld [vmem:[%s3 + $0x18] sm:$0xf]
  %v326 = vld [vmem:[%s3 + $0x1c] sm:$0xf]
  %v327 = vld [vmem:[%s3 + $0x20] sm:$0xf]
  %v328 = vld [vmem:[%s3 + $0x24] sm:$0xf]
  %v329 = vld [vmem:[%s3 + $0x28] sm:$0xf]
  %v330 = vld [vmem:[%s3 + $0x2c] sm:$0xf]
  %v331 = vld [vmem:[%s3 + $0x30] sm:$0xf]
  %v332 = vld [vmem:[%s3 + $0x34] sm:$0xf]
  %v333 = vld [vmem:[%s3 + $0x38] sm:$0xf]
  %v334 = vld [vmem:[%s3 + $0x3c] sm:$0xf]
  %v335 = vld [vmem:[%s4] sm:$0x1]
  %v337 = vperm.slane %v335, 0
  %v355 = vunpack.c.l.b16 %v319
  %v356 = vunpack.c.l.b16 %v320
  %v357 = vunpack.c.l.b16 %v321
  %v358 = vunpack.c.l.b16 %v322
  %v359 = vunpack.c.l.b16 %v323
  %v360 = vunpack.c.l.b16 %v324
  %v361 = vunpack.c.l.b16 %v325
  %v362 = vunpack.c.l.b16 %v326
  %v363 = vunpack.c.l.b16 %v327
  %v364 = vunpack.c.l.b16 %v328
  %v365 = vunpack.c.l.b16 %v329
  %v366 = vunpack.c.l.b16 %v330
  %v367 = vunpack.c.l.b16 %v331
  %v368 = vunpack.c.l.b16 %v332
  %v369 = vunpack.c.l.b16 %v333
  %v370 = vunpack.c.l.b16 %v334
  %v371 = vpack.c.b16 %v356, %v355
  %v372 = vpack.c.b16 %v358, %v357
  %v373 = vpack.c.b16 %v360, %v359
  %v374 = vpack.c.b16 %v362, %v361
  %v375 = vpack.c.b16 %v364, %v363
  %v376 = vpack.c.b16 %v366, %v365
  %v377 = vpack.c.b16 %v368, %v367
  %v378 = vpack.c.b16 %v370, %v369
  %387 = vmatpush.bf16.msra.mxu0 %v378
  %388 = vmatpush.bf16.msra.mxu0 %v377
  %389 = vmatpush.bf16.msra.mxu0 %v376
  %390 = vmatpush.bf16.msra.mxu0 %v375
  %391 = vmatpush.bf16.msra.mxu0 %v374
  %392 = vmatpush.bf16.msra.mxu0 %v373
  %393 = vmatpush.bf16.msra.mxu0 %v372
  %394 = vmatpush.bf16.msra.mxu0 %v371
  %395 = vmatmul.bf16.gmra.mxu0 %v318
  %v396 = vpop.f32.mrf.mxu0
  %v397 = vadd.f32 %v337, %v396
  %v398 = vpop.f32.mrf.mxu0
  %v399 = vadd.f32 %v337, %v398
  %400 = vdwg.mxu0
  %v401 = vmax.f32 %v397, 0.0
  %v402 = vmax.f32 %v399, 0.0
  %v403 = vpack.c.bf16 %v402, %v401
  %v404 = vld [vmem:[%s5] sm:$0xf]
  %v405 = vld [vmem:[%s5 + $0x4] sm:$0xf]
  %v406 = vld [vmem:[%s5 + $0x8] sm:$0xf]
  %v407 = vld [vmem:[%s5 + $0xc] sm:$0xf]
  %v408 = vld [vmem:[%s5 + $0x10] sm:$0xf]
  %v409 = vld [vmem:[%s5 + $0x14] sm:$0xf]
  %v410 = vld [vmem:[%s5 + $0x18] sm:$0xf]
  %v411 = vld [vmem:[%s5 + $0x1c] sm:$0xf]
  %v412 = vld [vmem:[%s5 + $0x20] sm:$0xf]
  %v413 = vld [vmem:[%s5 + $0x24] sm:$0xf]
  %v414 = vld [vmem:[%s5 + $0x28] sm:$0xf]
  %v415 = vld [vmem:[%s5 + $0x2c] sm:$0xf]
  %v416 = vld [vmem:[%s5 + $0x30] sm:$0xf]
  %v417 = vld [vmem:[%s5 + $0x34] sm:$0xf]
  %v418 = vld [vmem:[%s5 + $0x38] sm:$0xf]
  %v419 = vld [vmem:[%s5 + $0x3c] sm:$0xf]
  %v420 = vld [vmem:[%s6] sm:$0x1]
  %v422 = vperm.slane %v420, 0
  %v440 = vunpack.c.l.b16 %v404
  %v441 = vunpack.c.l.b16 %v405
  %v442 = vunpack.c.l.b16 %v406
  %v443 = vunpack.c.l.b16 %v407
  %v444 = vunpack.c.l.b16 %v408
  %v445 = vunpack.c.l.b16 %v409
  %v446 = vunpack.c.l.b16 %v410
  %v447 = vunpack.c.l.b16 %v411
  %v448 = vunpack.c.l.b16 %v412
  %v449 = vunpack.c.l.b16 %v413
  %v450 = vunpack.c.l.b16 %v414
  %v451 = vunpack.c.l.b16 %v415
  %v452 = vunpack.c.l.b16 %v416
  %v453 = vunpack.c.l.b16 %v417
  %v454 = vunpack.c.l.b16 %v418
  %v455 = vunpack.c.l.b16 %v419
  %v456 = vpack.c.b16 %v441, %v440
  %v457 = vpack.c.b16 %v443, %v442
  %v458 = vpack.c.b16 %v445, %v444
  %v459 = vpack.c.b16 %v447, %v446
  %v460 = vpack.c.b16 %v449, %v448
  %v461 = vpack.c.b16 %v451, %v450
  %v462 = vpack.c.b16 %v453, %v452
  %v463 = vpack.c.b16 %v455, %v454
  %472 = vmatpush.bf16.msra.mxu0 %v463
  %473 = vmatpush.bf16.msra.mxu0 %v462
  %474 = vmatpush.bf16.msra.mxu0 %v461
  %475 = vmatpush.bf16.msra.mxu0 %v460
  %476 = vmatpush.bf16.msra.mxu0 %v459
  %477 = vmatpush.bf16.msra.mxu0 %v458
  %478 = vmatpush.bf16.msra.mxu0 %v457
  %479 = vmatpush.bf16.msra.mxu0 %v456
  %480 = vmatmul.bf16.gmra.mxu0 %v403
  %v481 = vpop.f32.mrf.mxu0
  %v482 = vadd.f32 %v422, %v481
  %v483 = vpop.f32.mrf.mxu0
  %v484 = vadd.f32 %v422, %v483
  %485 = vdwg.mxu0
  %v486 = vlaneseq
  %v487 = vand.u32 %v486, 127
  %vm488 = vcmp.lt.s32.totalorder %v487, 10
  %v489 = vsel %vm488, %v482, -inf
  %v490 = vsel %vm488, %v484, -inf
  %491 = vmax.xlane.f32.xlu0 %v489
  %v492 = vpop.xlane.xlu0 %491
  %493 = vmax.xlane.f32.xlu0 %v490
  %v494 = vpop.xlane.xlu0 %493
  %v495 = vsub.f32 %v482, %v492
  %v496 = vsub.f32 %v484, %v494
  %v497 = vmul.f32 %v495, 1.442695
  %v498 = vpow.pop %v497
  %v499 = vmul.f32 %v496, 1.442695
  %v500 = vpow.pop %v499
  %v501 = vsel %vm488, %v498, 0.0
  %v502 = vsel %vm488, %v500, 0.0
  %503 = vadd.xlane.f32.xlu0 %v501
  %v504 = vpop.xlane.xlu0 %503
  %505 = vadd.xlane.f32.xlu0 %v502
  %v506 = vpop.xlane.xlu0 %505
  %507 = vst [vmem:[%s7] sm:$0xff] %v482
  %508 = vst [vmem:[%s7 + $0x8] sm:$0xff] %v484
  %v509 = vlog2.pop %v504
  %v510 = vmul.f32 %v509, 0.6931472
  %v511 = vlog2.pop %v506
  %v512 = vmul.f32 %v511, 0.6931472
  %v513 = vsub.f32 %v495, %v510
  %v514 = vsub.f32 %v496, %v512
  %v515 = vsel %vm488, %v513, 0.0
  %v516 = vsel %vm488, %v514, 0.0
  %517 = vst [vmem:[%s8] sm:$0xff] %v515
  %518 = vst [vmem:[%s8 + $0x8] sm:$0xff] %v516
  // Predicated region
  $region30: #{simple_cnn_forward.5} parent=0 // pred_check
    _
  $region31: #{simple_cnn_forward.5} parent=0 // pred_check_branch
    %520 = sbr.rel (0) target = $region33
  $region32: #{simple_cnn_forward.5} parent=0 // pred_region
    _
  $region33: #{simple_cnn_forward.5} parent=0 // pred_fallthru
    _
  // Predicated region
  $region34: #{simple_cnn_forward.5} parent=0 // pred_check
    _
  $region35: #{simple_cnn_forward.5} parent=0 // pred_check_branch
    %522 = sbr.rel (0) target = $region37
  $region36: #{simple_cnn_forward.5} parent=0 // pred_region
    _
  $region37: #{simple_cnn_forward.5} parent=0 // pred_fallthru
    _
  // Predicated region
  $region38: #{simple_cnn_forward.5} parent=0 // pred_check
    _
  $region39: #{simple_cnn_forward.5} parent=0 // pred_check_branch
    %524 = sbr.rel (0) target = $region41
  $region40: #{simple_cnn_forward.5} parent=0 // pred_region
    _
  $region41: #{simple_cnn_forward.5} parent=0 // pred_fallthru
    _
  // Predicated region
  $region42: #{simple_cnn_forward.5} parent=0 // pred_check
    _
  $region43: #{simple_cnn_forward.5} parent=0 // pred_check_branch
    %526 = sbr.rel (0) target = $region45
  $region44: #{simple_cnn_forward.5} parent=0 // pred_region
    _
  $region45: #{simple_cnn_forward.5} parent=0 // pred_fallthru
    _

</llo_original>
